<compile_context>
chip_gen: v7x
topology: tpu7x:2x2x1
jax: 0.10.0
libtpu: 0.0.40
codegen_flags: <defaults>
</compile_context>

<pallas_src>
import functools

import jax
import jax.numpy as jnp
from jax.experimental import pallas as pl
from jax.experimental.pallas import tpu as pltpu

LEAKY_SLOPE = 0.2


def _deconv_phase_kernel(*refs, KT, KH, KW, C, H, W):
    """One (batch, output frame) per grid step.

    refs = (x_tap_0 .. x_tap_{KT-1}, w, b, out, patch_scratch)
      x_tap_dt : (1, 1, H+2ph, W+2pw, C)  time/space zero-padded original-res frame l+dt
      w        : (KT*KH*KW*C, s*s*Cout)   phase-folded weight, bf16
      b        : (1, s*s*Cout)            phase-tiled bias, f32
      out      : (1, 1, H*W, s*s*Cout)
      patch    : (H*W, KT*KH*KW*C)        VMEM im2col scratch, f32
    """
    x_refs = refs[:KT]
    w_ref = refs[KT]
    b_ref = refs[KT + 1]
    o_ref = refs[KT + 2]
    patch_ref = refs[KT + 3]

    # im2col at ORIGINAL resolution: pack every (dt, dh, dw, c) tap onto the
    # lane / contraction axis.  The (H, W, C) -> (H*W, C) flatten keeps the
    # minor (lane) dim untouched, so it is a cheap sublane-only relayout.
    tap = 0
    for dt in range(KT):
        for dh in range(KH):
            for dw in range(KW):
                win = x_refs[dt][0, 0, dh:dh + H, dw:dw + W, :]        # (H, W, C)
                patch_ref[:, tap * C:(tap + 1) * C] = win.reshape(H * W, C)
                tap += 1

    # Single MXU contraction per grid step (bf16 operands, f32 accumulation).
    y = jnp.dot(patch_ref[...].astype(jnp.bfloat16), w_ref[...],
                preferred_element_type=jnp.float32)                    # (H*W, s*s*Cout)
    y = y + b_ref[...]                                                 # bias broadcast
    y = jnp.where(y > 0, y, LEAKY_SLOPE * y)                           # LeakyReLU(0.2)
    o_ref[0, 0] = y.astype(o_ref.dtype)


def _fold_phase_weight(weight, s, ph, pw):
    """Fold nearest-upsample(s) + conv into s*s phase weights.

    weight: (Cout, Cin, KT, KH, KW)  ->  (KT*KH*KW*Cin, s*s*Cout)

    For output pixel (s*i + a, s*j + b) the conv over the upsampled-and-padded
    frame only ever reads original pixels x[i + dh - ph, j + dw - pw]; summing
    the original conv taps that land on the same source pixel gives, per phase
    (a, b), a weight over an original-resolution KHxKW window.  The kernel then
    never has to materialise the upsample at all.
    """
    Cout, Cin, KT, KH, KW = weight.shape
    w_t = jnp.transpose(weight, (0, 2, 3, 4, 1))            # (Cout, KT, KH, KW, Cin)
    w_eff = jnp.zeros((s, s, Cout, KT, KH, KW, Cin), dtype=jnp.float32)
    for a in range(s):
        for b in range(s):
            for dh_src in range(KH):
                dh_dst = (a - ph + dh_src) // s + ph        # floor div, lands in [0, KH)
                for dw_src in range(KW):
                    dw_dst = (b - pw + dw_src) // s + pw
                    w_eff = w_eff.at[a, b, :, :, dh_dst, dw_dst, :].add(
                        w_t[:, :, dh_src, dw_src, :])
    # rows (contraction): ((dt*KH + dh)*KW + dw)*Cin + c ; cols: (a*s + b)*Cout + co
    return w_eff.reshape(s * s * Cout, KT * KH * KW * Cin).T


def vanilla_deconv_forward(xs, weight, bias, *, scale_factor=2, padding=1):
    """xs: (B, C, L, H, W) f32 (PyTorch NCDHW). Returns (B, Cout, L_out, s*H, s*W)."""
    B, C, L, H, W = xs.shape
    Cout, Cin, KT, KH, KW = weight.shape
    s = int(scale_factor)
    pt = ph = pw = int(padding)

    # Loud asserts for the configuration this fast path implements (DLAVC's
    # VanillaDeconv: stride 1, dilation 1, groups 1, odd spatial kernel with
    # 'same' spatial padding, integer scale factor).
    assert Cin == C, (Cin, C)
    assert s >= 1
    assert KH % 2 == 1 and KW % 2 == 1, "odd spatial kernel required"
    assert ph == (KH - 1) // 2 and pw == (KW - 1) // 2, (
        "phase-folded fast path requires 'same' spatial padding "
        "(padding == (kernel_size - 1) // 2)")
    Lo = L + 2 * pt - KT + 1
    assert Lo >= 1, "output clip length must be positive"
    # TODO(synk): general stride / dilation / groups / non-'same' spatial padding
    # (unused by DLAVC's VanillaDeconv) are asserted out, not implemented.

    Kdim = KT * KH * KW * C
    M = s * s * Cout
    Hp, Wp = H + 2 * ph, W + 2 * pw

    # --- parameter prep (plain JAX on tiny arrays) --------------------------
    w2 = _fold_phase_weight(weight, s, ph, pw).astype(jnp.bfloat16)     # (Kdim, M)
    b2 = jnp.tile(bias.astype(jnp.float32), s * s).reshape(1, M)        # (1, M)

    # --- input prep: channels-last, zero-pad time + original-res space ------
    x = jnp.transpose(xs, (0, 2, 3, 4, 1))                              # (B, L, H, W, C)
    x = jnp.pad(x, ((0, 0), (pt, pt), (ph, ph), (pw, pw), (0, 0)))      # (B, L+2pt, Hp, Wp, C)

    kernel = functools.partial(_deconv_phase_kernel,
                               KT=KT, KH=KH, KW=KW, C=C, H=H, W=W)

    # One in_spec per time tap: the same (small) original-resolution array is
    # passed KT times, each spec DMA-ing frame l + dt for grid step (b, l).
    in_specs = [
        pl.BlockSpec((1, 1, Hp, Wp, C),
                     lambda bb, ll, dt=dt: (bb, ll + dt, 0, 0, 0))
        for dt in range(KT)
    ] + [
        pl.BlockSpec((Kdim, M), lambda bb, ll: (0, 0)),
        pl.BlockSpec((1, M), lambda bb, ll: (0, 0)),
    ]

    out = pl.pallas_call(
        kernel,
        out_shape=jax.ShapeDtypeStruct((B, Lo, H * W, M), xs.dtype),
        grid=(B, Lo),
        in_specs=in_specs,
        out_specs=pl.BlockSpec((1, 1, H * W, M), lambda bb, ll: (bb, ll, 0, 0)),
        scratch_shapes=[pltpu.VMEM((H * W, Kdim), jnp.float32)],
        compiler_params=pltpu.CompilerParams(
            dimension_semantics=("parallel", "parallel"),
            vmem_limit_bytes=32 * 1024 * 1024),
    )(*([x] * KT), w2, b2)

    # --- depth-to-space + back to PyTorch NCDHW (layout plumbing only) ------
    o = out.reshape(B, Lo, H, W, s, s, Cout)        # [b, l, i, j, a, b_ph, co]
    o = jnp.transpose(o, (0, 6, 1, 2, 4, 3, 5))     # [b, co, l, i, a, j, b_ph]
    return o.reshape(B, Cout, Lo, H * s, W * s)


if __name__ == "__main__":
    key = jax.random.PRNGKey(0)
    k1, k2, k3, k4 = jax.random.split(key, 4)

    # Small shapes consistent with the module: video (B, C, L, H, W).
    B, Cin, L, H, W = 2, 4, 3, 8, 8
    Cout, K = 8, 3
    scale, pad = 2, 1

    xs = jax.random.normal(k1, (B, Cin, L, H, W), dtype=jnp.float32)
    weight = jax.random.normal(k2, (Cout, Cin, K, K, K), dtype=jnp.float32) * 0.1
    bias = jax.random.normal(k3, (Cout,), dtype=jnp.float32) * 0.1

    # norm='SN': spectral-norm weight re-parameterisation (one power iteration,
    # PyTorch default) — deterministic parameter prep, not a forward-time op.
    # TODO(synk): PyTorch persists the power-iteration vector u across calls; here
    # it is sampled once from the fixed PRNG key.
    w_mat = weight.reshape(Cout, -1)
    u = jax.random.normal(k4, (Cout,), dtype=jnp.float32)
    u = u / (jnp.linalg.norm(u) + 1e-12)
    v = w_mat.T @ u
    v = v / (jnp.linalg.norm(v) + 1e-12)
    u = w_mat @ v
    u = u / (jnp.linalg.norm(u) + 1e-12)
    sigma = u @ (w_mat @ v)
    weight_sn = weight / sigma

    out = vanilla_deconv_forward(xs, weight_sn, bias, scale_factor=scale, padding=pad)
    jax.block_until_ready(out)
    assert out.shape == (B, Cout, L, H * scale, W * scale), out.shape

    # Pure-JAX reference (nearest upsample -> conv3d -> bias -> LeakyReLU) to
    # validate the phase-folded kernel.  Loose tolerance: the kernel matmul
    # runs in bf16 with f32 accumulation.
    x_up = jnp.repeat(jnp.repeat(xs, scale, axis=3), scale, axis=4)
    ref = jax.lax.conv_general_dilated(
        x_up, weight_sn, window_strides=(1, 1, 1),
        padding=[(pad, pad)] * 3,
        dimension_numbers=("NCDHW", "OIDHW", "NCDHW"),
        precision=jax.lax.Precision.HIGHEST)
    ref = ref + bias.reshape(1, -1, 1, 1, 1)
    ref = jnp.where(ref > 0, ref, LEAKY_SLOPE * ref)
    max_err = float(jnp.max(jnp.abs(out - ref)))
    assert max_err < 0.1, f"kernel/reference mismatch: max abs err {max_err}"

    print("KERNEL_OK")
</pallas_src>

<mosaic_0001>
module attributes {stable_mosaic.version = 11 : i64} {
  func.func @_deconv_phase_kernel(%arg0: i32, %arg1: i32, %arg2: memref<1x1x10x10x4xf32, #tpu.memory_space<vmem>>, %arg3: memref<1x1x10x10x4xf32, #tpu.memory_space<vmem>>, %arg4: memref<1x1x10x10x4xf32, #tpu.memory_space<vmem>>, %arg5: memref<108x32xbf16, #tpu.memory_space<vmem>>, %arg6: memref<1x32xf32, #tpu.memory_space<vmem>>, %arg7: memref<1x1x64x32xf32, #tpu.memory_space<vmem>>, %arg8: memref<64x108xf32, #tpu.memory_space<vmem>>) attributes {dimension_semantics = [#tpu.dimension_semantics<parallel>, #tpu.dimension_semantics<parallel>], iteration_bounds = array<i64: 2, 3>, scalar_prefetch = 0 : i64, scratch_operands = 1 : i64, tpu.core_type = #tpu.core_type<tc>, window_params = [{transform_indices = @transform_0, window_bounds = array<i64: 1, 1, 10, 10, 4>}, {transform_indices = @transform_1, window_bounds = array<i64: 1, 1, 10, 10, 4>}, {transform_indices = @transform_2, window_bounds = array<i64: 1, 1, 10, 10, 4>}, {pipeline_mode = #tpu.pipeline_mode<synchronous>, transform_indices = @transform_3, window_bounds = array<i64: 108, 32>}, {pipeline_mode = #tpu.pipeline_mode<synchronous>, transform_indices = @transform_4, window_bounds = array<i64: 1, 32>}, {transform_indices = @transform_5, window_bounds = array<i64: 1, 1, 64, 32>}]} {
    %c0 = arith.constant 0 : index
    %c0_0 = arith.constant 0 : index
    %c0_1 = arith.constant 0 : index
    %c0_2 = arith.constant 0 : index
    %c0_3 = arith.constant 0 : index
    %0 = vector.load %arg2[%c0, %c0_0, %c0_1, %c0_2, %c0_3] : memref<1x1x10x10x4xf32, #tpu.memory_space<vmem>>, vector<1x1x8x8x4xf32>
    %1 = vector.shape_cast %0 : vector<1x1x8x8x4xf32> to vector<8x8x4xf32>
    %2 = vector.shape_cast %1 : vector<8x8x4xf32> to vector<64x4xf32>
    %c0_4 = arith.constant 0 : index
    %c0_5 = arith.constant 0 : index
    %3 = vector.load %arg8[%c0_4, %c0_5] : memref<64x108xf32, #tpu.memory_space<vmem>>, vector<64x4xf32>
    tpu.vector_store %arg8[%c0_4, %c0_5], %2 {strides = array<i32>} : memref<64x108xf32, #tpu.memory_space<vmem>>, vector<64x4xf32>,
    %c0_6 = arith.constant 0 : index
    %c0_7 = arith.constant 0 : index
    %c0_8 = arith.constant 0 : index
    %c1 = arith.constant 1 : index
    %c0_9 = arith.constant 0 : index
    %4 = vector.load %arg2[%c0_6, %c0_7, %c0_8, %c1, %c0_9] : memref<1x1x10x10x4xf32, #tpu.memory_space<vmem>>, vector<1x1x8x8x4xf32>
    %5 = vector.shape_cast %4 : vector<1x1x8x8x4xf32> to vector<8x8x4xf32>
    %6 = vector.shape_cast %5 : vector<8x8x4xf32> to vector<64x4xf32>
    %c0_10 = arith.constant 0 : index
    %c4 = arith.constant 4 : index
    %7 = vector.load %arg8[%c0_10, %c4] : memref<64x108xf32, #tpu.memory_space<vmem>>, vector<64x4xf32>
    tpu.vector_store %arg8[%c0_10, %c4], %6 {strides = array<i32>} : memref<64x108xf32, #tpu.memory_space<vmem>>, vector<64x4xf32>,
    %c0_11 = arith.constant 0 : index
    %c0_12 = arith.constant 0 : index
    %c0_13 = arith.constant 0 : index
    %c2 = arith.constant 2 : index
    %c0_14 = arith.constant 0 : index
    %8 = vector.load %arg2[%c0_11, %c0_12, %c0_13, %c2, %c0_14] : memref<1x1x10x10x4xf32, #tpu.memory_space<vmem>>, vector<1x1x8x8x4xf32>
    %9 = vector.shape_cast %8 : vector<1x1x8x8x4xf32> to vector<8x8x4xf32>
    %10 = vector.shape_cast %9 : vector<8x8x4xf32> to vector<64x4xf32>
    %c0_15 = arith.constant 0 : index
    %c8 = arith.constant 8 : index
    %11 = vector.load %arg8[%c0_15, %c8] : memref<64x108xf32, #tpu.memory_space<vmem>>, vector<64x4xf32>
    tpu.vector_store %arg8[%c0_15, %c8], %10 {strides = array<i32>} : memref<64x108xf32, #tpu.memory_space<vmem>>, vector<64x4xf32>,
    %c0_16 = arith.constant 0 : index
    %c0_17 = arith.constant 0 : index
    %c1_18 = arith.constant 1 : index
    %c0_19 = arith.constant 0 : index
    %c0_20 = arith.constant 0 : index
    %12 = vector.load %arg2[%c0_16, %c0_17, %c1_18, %c0_19, %c0_20] : memref<1x1x10x10x4xf32, #tpu.memory_space<vmem>>, vector<1x1x8x8x4xf32>
    %13 = vector.shape_cast %12 : vector<1x1x8x8x4xf32> to vector<8x8x4xf32>
    %14 = vector.shape_cast %13 : vector<8x8x4xf32> to vector<64x4xf32>
    %c0_21 = arith.constant 0 : index
    %c12 = arith.constant 12 : index
    %15 = vector.load %arg8[%c0_21, %c12] : memref<64x108xf32, #tpu.memory_space<vmem>>, vector<64x4xf32>
    tpu.vector_store %arg8[%c0_21, %c12], %14 {strides = array<i32>} : memref<64x108xf32, #tpu.memory_space<vmem>>, vector<64x4xf32>,
    %c0_22 = arith.constant 0 : index
    %c0_23 = arith.constant 0 : index
    %c1_24 = arith.constant 1 : index
    %c1_25 = arith.constant 1 : index
    %c0_26 = arith.constant 0 : index
    %16 = vector.load %arg2[%c0_22, %c0_23, %c1_24, %c1_25, %c0_26] : memref<1x1x10x10x4xf32, #tpu.memory_space<vmem>>, vector<1x1x8x8x4xf32>
    %17 = vector.shape_cast %16 : vector<1x1x8x8x4xf32> to vector<8x8x4xf32>
    %18 = vector.shape_cast %17 : vector<8x8x4xf32> to vector<64x4xf32>
    %c0_27 = arith.constant 0 : index
    %c16 = arith.constant 16 : index
    %19 = vector.load %arg8[%c0_27, %c16] : memref<64x108xf32, #tpu.memory_space<vmem>>, vector<64x4xf32>
    tpu.vector_store %arg8[%c0_27, %c16], %18 {strides = array<i32>} : memref<64x108xf32, #tpu.memory_space<vmem>>, vector<64x4xf32>,
    %c0_28 = arith.constant 0 : index
    %c0_29 = arith.constant 0 : index
    %c1_30 = arith.constant 1 : index
    %c2_31 = arith.constant 2 : index
    %c0_32 = arith.constant 0 : index
    %20 = vector.load %arg2[%c0_28, %c0_29, %c1_30, %c2_31, %c0_32] : memref<1x1x10x10x4xf32, #tpu.memory_space<vmem>>, vector<1x1x8x8x4xf32>
    %21 = vector.shape_cast %20 : vector<1x1x8x8x4xf32> to vector<8x8x4xf32>
    %22 = vector.shape_cast %21 : vector<8x8x4xf32> to vector<64x4xf32>
    %c0_33 = arith.constant 0 : index
    %c20 = arith.constant 20 : index
    %23 = vector.load %arg8[%c0_33, %c20] : memref<64x108xf32, #tpu.memory_space<vmem>>, vector<64x4xf32>
    tpu.vector_store %arg8[%c0_33, %c20], %22 {strides = array<i32>} : memref<64x108xf32, #tpu.memory_space<vmem>>, vector<64x4xf32>,
    %c0_34 = arith.constant 0 : index
    %c0_35 = arith.constant 0 : index
    %c2_36 = arith.constant 2 : index
    %c0_37 = arith.constant 0 : index
    %c0_38 = arith.constant 0 : index
    %24 = vector.load %arg2[%c0_34, %c0_35, %c2_36, %c0_37, %c0_38] : memref<1x1x10x10x4xf32, #tpu.memory_space<vmem>>, vector<1x1x8x8x4xf32>
    %25 = vector.shape_cast %24 : vector<1x1x8x8x4xf32> to vector<8x8x4xf32>
    %26 = vector.shape_cast %25 : vector<8x8x4xf32> to vector<64x4xf32>
    %c0_39 = arith.constant 0 : index
    %c24 = arith.constant 24 : index
    %27 = vector.load %arg8[%c0_39, %c24] : memref<64x108xf32, #tpu.memory_space<vmem>>, vector<64x4xf32>
    tpu.vector_store %arg8[%c0_39, %c24], %26 {strides = array<i32>} : memref<64x108xf32, #tpu.memory_space<vmem>>, vector<64x4xf32>,
    %c0_40 = arith.constant 0 : index
    %c0_41 = arith.constant 0 : index
    %c2_42 = arith.constant 2 : index
    %c1_43 = arith.constant 1 : index
    %c0_44 = arith.constant 0 : index
    %28 = vector.load %arg2[%c0_40, %c0_41, %c2_42, %c1_43, %c0_44] : memref<1x1x10x10x4xf32, #tpu.memory_space<vmem>>, vector<1x1x8x8x4xf32>
    %29 = vector.shape_cast %28 : vector<1x1x8x8x4xf32> to vector<8x8x4xf32>
    %30 = vector.shape_cast %29 : vector<8x8x4xf32> to vector<64x4xf32>
    %c0_45 = arith.constant 0 : index
    %c28 = arith.constant 28 : index
    %31 = vector.load %arg8[%c0_45, %c28] : memref<64x108xf32, #tpu.memory_space<vmem>>, vector<64x4xf32>
    tpu.vector_store %arg8[%c0_45, %c28], %30 {strides = array<i32>} : memref<64x108xf32, #tpu.memory_space<vmem>>, vector<64x4xf32>,
    %c0_46 = arith.constant 0 : index
    %c0_47 = arith.constant 0 : index
    %c2_48 = arith.constant 2 : index
    %c2_49 = arith.constant 2 : index
    %c0_50 = arith.constant 0 : index
    %32 = vector.load %arg2[%c0_46, %c0_47, %c2_48, %c2_49, %c0_50] : memref<1x1x10x10x4xf32, #tpu.memory_space<vmem>>, vector<1x1x8x8x4xf32>
    %33 = vector.shape_cast %32 : vector<1x1x8x8x4xf32> to vector<8x8x4xf32>
    %34 = vector.shape_cast %33 : vector<8x8x4xf32> to vector<64x4xf32>
    %c0_51 = arith.constant 0 : index
    %c32 = arith.constant 32 : index
    %35 = vector.load %arg8[%c0_51, %c32] : memref<64x108xf32, #tpu.memory_space<vmem>>, vector<64x4xf32>
    tpu.vector_store %arg8[%c0_51, %c32], %34 {strides = array<i32>} : memref<64x108xf32, #tpu.memory_space<vmem>>, vector<64x4xf32>,
    %c0_52 = arith.constant 0 : index
    %c0_53 = arith.constant 0 : index
    %c0_54 = arith.constant 0 : index
    %c0_55 = arith.constant 0 : index
    %c0_56 = arith.constant 0 : index
    %36 = vector.load %arg3[%c0_52, %c0_53, %c0_54, %c0_55, %c0_56] : memref<1x1x10x10x4xf32, #tpu.memory_space<vmem>>, vector<1x1x8x8x4xf32>
    %37 = vector.shape_cast %36 : vector<1x1x8x8x4xf32> to vector<8x8x4xf32>
    %38 = vector.shape_cast %37 : vector<8x8x4xf32> to vector<64x4xf32>
    %c0_57 = arith.constant 0 : index
    %c36 = arith.constant 36 : index
    %39 = vector.load %arg8[%c0_57, %c36] : memref<64x108xf32, #tpu.memory_space<vmem>>, vector<64x4xf32>
    tpu.vector_store %arg8[%c0_57, %c36], %38 {strides = array<i32>} : memref<64x108xf32, #tpu.memory_space<vmem>>, vector<64x4xf32>,
    %c0_58 = arith.constant 0 : index
    %c0_59 = arith.constant 0 : index
    %c0_60 = arith.constant 0 : index
    %c1_61 = arith.constant 1 : index
    %c0_62 = arith.constant 0 : index
    %40 = vector.load %arg3[%c0_58, %c0_59, %c0_60, %c1_61, %c0_62] : memref<1x1x10x10x4xf32, #tpu.memory_space<vmem>>, vector<1x1x8x8x4xf32>
    %41 = vector.shape_cast %40 : vector<1x1x8x8x4xf32> to vector<8x8x4xf32>
    %42 = vector.shape_cast %41 : vector<8x8x4xf32> to vector<64x4xf32>
    %c0_63 = arith.constant 0 : index
    %c40 = arith.constant 40 : index
    %43 = vector.load %arg8[%c0_63, %c40] : memref<64x108xf32, #tpu.memory_space<vmem>>, vector<64x4xf32>
    tpu.vector_store %arg8[%c0_63, %c40], %42 {strides = array<i32>} : memref<64x108xf32, #tpu.memory_space<vmem>>, vector<64x4xf32>,
    %c0_64 = arith.constant 0 : index
    %c0_65 = arith.constant 0 : index
    %c0_66 = arith.constant 0 : index
    %c2_67 = arith.constant 2 : index
    %c0_68 = arith.constant 0 : index
    %44 = vector.load %arg3[%c0_64, %c0_65, %c0_66, %c2_67, %c0_68] : memref<1x1x10x10x4xf32, #tpu.memory_space<vmem>>, vector<1x1x8x8x4xf32>
    %45 = vector.shape_cast %44 : vector<1x1x8x8x4xf32> to vector<8x8x4xf32>
    %46 = vector.shape_cast %45 : vector<8x8x4xf32> to vector<64x4xf32>
    %c0_69 = arith.constant 0 : index
    %c44 = arith.constant 44 : index
    %47 = vector.load %arg8[%c0_69, %c44] : memref<64x108xf32, #tpu.memory_space<vmem>>, vector<64x4xf32>
    tpu.vector_store %arg8[%c0_69, %c44], %46 {strides = array<i32>} : memref<64x108xf32, #tpu.memory_space<vmem>>, vector<64x4xf32>,
    %c0_70 = arith.constant 0 : index
    %c0_71 = arith.constant 0 : index
    %c1_72 = arith.constant 1 : index
    %c0_73 = arith.constant 0 : index
    %c0_74 = arith.constant 0 : index
    %48 = vector.load %arg3[%c0_70, %c0_71, %c1_72, %c0_73, %c0_74] : memref<1x1x10x10x4xf32, #tpu.memory_space<vmem>>, vector<1x1x8x8x4xf32>
    %49 = vector.shape_cast %48 : vector<1x1x8x8x4xf32> to vector<8x8x4xf32>
    %50 = vector.shape_cast %49 : vector<8x8x4xf32> to vector<64x4xf32>
    %c0_75 = arith.constant 0 : index
    %c48 = arith.constant 48 : index
    %51 = vector.load %arg8[%c0_75, %c48] : memref<64x108xf32, #tpu.memory_space<vmem>>, vector<64x4xf32>
    tpu.vector_store %arg8[%c0_75, %c48], %50 {strides = array<i32>} : memref<64x108xf32, #tpu.memory_space<vmem>>, vector<64x4xf32>,
    %c0_76 = arith.constant 0 : index
    %c0_77 = arith.constant 0 : index
    %c1_78 = arith.constant 1 : index
    %c1_79 = arith.constant 1 : index
    %c0_80 = arith.constant 0 : index
    %52 = vector.load %arg3[%c0_76, %c0_77, %c1_78, %c1_79, %c0_80] : memref<1x1x10x10x4xf32, #tpu.memory_space<vmem>>, vector<1x1x8x8x4xf32>
    %53 = vector.shape_cast %52 : vector<1x1x8x8x4xf32> to vector<8x8x4xf32>
    %54 = vector.shape_cast %53 : vector<8x8x4xf32> to vector<64x4xf32>
    %c0_81 = arith.constant 0 : index
    %c52 = arith.constant 52 : index
    %55 = vector.load %arg8[%c0_81, %c52] : memref<64x108xf32, #tpu.memory_space<vmem>>, vector<64x4xf32>
    tpu.vector_store %arg8[%c0_81, %c52], %54 {strides = array<i32>} : memref<64x108xf32, #tpu.memory_space<vmem>>, vector<64x4xf32>,
    %c0_82 = arith.constant 0 : index
    %c0_83 = arith.constant 0 : index
    %c1_84 = arith.constant 1 : index
    %c2_85 = arith.constant 2 : index
    %c0_86 = arith.constant 0 : index
    %56 = vector.load %arg3[%c0_82, %c0_83, %c1_84, %c2_85, %c0_86] : memref<1x1x10x10x4xf32, #tpu.memory_space<vmem>>, vector<1x1x8x8x4xf32>
    %57 = vector.shape_cast %56 : vector<1x1x8x8x4xf32> to vector<8x8x4xf32>
    %58 = vector.shape_cast %57 : vector<8x8x4xf32> to vector<64x4xf32>
    %c0_87 = arith.constant 0 : index
    %c56 = arith.constant 56 : index
    %59 = vector.load %arg8[%c0_87, %c56] : memref<64x108xf32, #tpu.memory_space<vmem>>, vector<64x4xf32>
    tpu.vector_store %arg8[%c0_87, %c56], %58 {strides = array<i32>} : memref<64x108xf32, #tpu.memory_space<vmem>>, vector<64x4xf32>,
    %c0_88 = arith.constant 0 : index
    %c0_89 = arith.constant 0 : index
    %c2_90 = arith.constant 2 : index
    %c0_91 = arith.constant 0 : index
    %c0_92 = arith.constant 0 : index
    %60 = vector.load %arg3[%c0_88, %c0_89, %c2_90, %c0_91, %c0_92] : memref<1x1x10x10x4xf32, #tpu.memory_space<vmem>>, vector<1x1x8x8x4xf32>
    %61 = vector.shape_cast %60 : vector<1x1x8x8x4xf32> to vector<8x8x4xf32>
    %62 = vector.shape_cast %61 : vector<8x8x4xf32> to vector<64x4xf32>
    %c0_93 = arith.constant 0 : index
    %c60 = arith.constant 60 : index
    %63 = vector.load %arg8[%c0_93, %c60] : memref<64x108xf32, #tpu.memory_space<vmem>>, vector<64x4xf32>
    tpu.vector_store %arg8[%c0_93, %c60], %62 {strides = array<i32>} : memref<64x108xf32, #tpu.memory_space<vmem>>, vector<64x4xf32>,
    %c0_94 = arith.constant 0 : index
    %c0_95 = arith.constant 0 : index
    %c2_96 = arith.constant 2 : index
    %c1_97 = arith.constant 1 : index
    %c0_98 = arith.constant 0 : index
    %64 = vector.load %arg3[%c0_94, %c0_95, %c2_96, %c1_97, %c0_98] : memref<1x1x10x10x4xf32, #tpu.memory_space<vmem>>, vector<1x1x8x8x4xf32>
    %65 = vector.shape_cast %64 : vector<1x1x8x8x4xf32> to vector<8x8x4xf32>
    %66 = vector.shape_cast %65 : vector<8x8x4xf32> to vector<64x4xf32>
    %c0_99 = arith.constant 0 : index
    %c64 = arith.constant 64 : index
    %67 = vector.load %arg8[%c0_99, %c64] : memref<64x108xf32, #tpu.memory_space<vmem>>, vector<64x4xf32>
    tpu.vector_store %arg8[%c0_99, %c64], %66 {strides = array<i32>} : memref<64x108xf32, #tpu.memory_space<vmem>>, vector<64x4xf32>,
    %c0_100 = arith.constant 0 : index
    %c0_101 = arith.constant 0 : index
    %c2_102 = arith.constant 2 : index
    %c2_103 = arith.constant 2 : index
    %c0_104 = arith.constant 0 : index
    %68 = vector.load %arg3[%c0_100, %c0_101, %c2_102, %c2_103, %c0_104] : memref<1x1x10x10x4xf32, #tpu.memory_space<vmem>>, vector<1x1x8x8x4xf32>
    %69 = vector.shape_cast %68 : vector<1x1x8x8x4xf32> to vector<8x8x4xf32>
    %70 = vector.shape_cast %69 : vector<8x8x4xf32> to vector<64x4xf32>
    %c0_105 = arith.constant 0 : index
    %c68 = arith.constant 68 : index
    %71 = vector.load %arg8[%c0_105, %c68] : memref<64x108xf32, #tpu.memory_space<vmem>>, vector<64x4xf32>
    tpu.vector_store %arg8[%c0_105, %c68], %70 {strides = array<i32>} : memref<64x108xf32, #tpu.memory_space<vmem>>, vector<64x4xf32>,
    %c0_106 = arith.constant 0 : index
    %c0_107 = arith.constant 0 : index
    %c0_108 = arith.constant 0 : index
    %c0_109 = arith.constant 0 : index
    %c0_110 = arith.constant 0 : index
    %72 = vector.load %arg4[%c0_106, %c0_107, %c0_108, %c0_109, %c0_110] : memref<1x1x10x10x4xf32, #tpu.memory_space<vmem>>, vector<1x1x8x8x4xf32>
    %73 = vector.shape_cast %72 : vector<1x1x8x8x4xf32> to vector<8x8x4xf32>
    %74 = vector.shape_cast %73 : vector<8x8x4xf32> to vector<64x4xf32>
    %c0_111 = arith.constant 0 : index
    %c72 = arith.constant 72 : index
    %75 = vector.load %arg8[%c0_111, %c72] : memref<64x108xf32, #tpu.memory_space<vmem>>, vector<64x4xf32>
    tpu.vector_store %arg8[%c0_111, %c72], %74 {strides = array<i32>} : memref<64x108xf32, #tpu.memory_space<vmem>>, vector<64x4xf32>,
    %c0_112 = arith.constant 0 : index
    %c0_113 = arith.constant 0 : index
    %c0_114 = arith.constant 0 : index
    %c1_115 = arith.constant 1 : index
    %c0_116 = arith.constant 0 : index
    %76 = vector.load %arg4[%c0_112, %c0_113, %c0_114, %c1_115, %c0_116] : memref<1x1x10x10x4xf32, #tpu.memory_space<vmem>>, vector<1x1x8x8x4xf32>
    %77 = vector.shape_cast %76 : vector<1x1x8x8x4xf32> to vector<8x8x4xf32>
    %78 = vector.shape_cast %77 : vector<8x8x4xf32> to vector<64x4xf32>
    %c0_117 = arith.constant 0 : index
    %c76 = arith.constant 76 : index
    %79 = vector.load %arg8[%c0_117, %c76] : memref<64x108xf32, #tpu.memory_space<vmem>>, vector<64x4xf32>
    tpu.vector_store %arg8[%c0_117, %c76], %78 {strides = array<i32>} : memref<64x108xf32, #tpu.memory_space<vmem>>, vector<64x4xf32>,
    %c0_118 = arith.constant 0 : index
    %c0_119 = arith.constant 0 : index
    %c0_120 = arith.constant 0 : index
    %c2_121 = arith.constant 2 : index
    %c0_122 = arith.constant 0 : index
    %80 = vector.load %arg4[%c0_118, %c0_119, %c0_120, %c2_121, %c0_122] : memref<1x1x10x10x4xf32, #tpu.memory_space<vmem>>, vector<1x1x8x8x4xf32>
    %81 = vector.shape_cast %80 : vector<1x1x8x8x4xf32> to vector<8x8x4xf32>
    %82 = vector.shape_cast %81 : vector<8x8x4xf32> to vector<64x4xf32>
    %c0_123 = arith.constant 0 : index
    %c80 = arith.constant 80 : index
    %83 = vector.load %arg8[%c0_123, %c80] : memref<64x108xf32, #tpu.memory_space<vmem>>, vector<64x4xf32>
    tpu.vector_store %arg8[%c0_123, %c80], %82 {strides = array<i32>} : memref<64x108xf32, #tpu.memory_space<vmem>>, vector<64x4xf32>,
    %c0_124 = arith.constant 0 : index
    %c0_125 = arith.constant 0 : index
    %c1_126 = arith.constant 1 : index
    %c0_127 = arith.constant 0 : index
    %c0_128 = arith.constant 0 : index
    %84 = vector.load %arg4[%c0_124, %c0_125, %c1_126, %c0_127, %c0_128] : memref<1x1x10x10x4xf32, #tpu.memory_space<vmem>>, vector<1x1x8x8x4xf32>
    %85 = vector.shape_cast %84 : vector<1x1x8x8x4xf32> to vector<8x8x4xf32>
    %86 = vector.shape_cast %85 : vector<8x8x4xf32> to vector<64x4xf32>
    %c0_129 = arith.constant 0 : index
    %c84 = arith.constant 84 : index
    %87 = vector.load %arg8[%c0_129, %c84] : memref<64x108xf32, #tpu.memory_space<vmem>>, vector<64x4xf32>
    tpu.vector_store %arg8[%c0_129, %c84], %86 {strides = array<i32>} : memref<64x108xf32, #tpu.memory_space<vmem>>, vector<64x4xf32>,
    %c0_130 = arith.constant 0 : index
    %c0_131 = arith.constant 0 : index
    %c1_132 = arith.constant 1 : index
    %c1_133 = arith.constant 1 : index
    %c0_134 = arith.constant 0 : index
    %88 = vector.load %arg4[%c0_130, %c0_131, %c1_132, %c1_133, %c0_134] : memref<1x1x10x10x4xf32, #tpu.memory_space<vmem>>, vector<1x1x8x8x4xf32>
    %89 = vector.shape_cast %88 : vector<1x1x8x8x4xf32> to vector<8x8x4xf32>
    %90 = vector.shape_cast %89 : vector<8x8x4xf32> to vector<64x4xf32>
    %c0_135 = arith.constant 0 : index
    %c88 = arith.constant 88 : index
    %91 = vector.load %arg8[%c0_135, %c88] : memref<64x108xf32, #tpu.memory_space<vmem>>, vector<64x4xf32>
    tpu.vector_store %arg8[%c0_135, %c88], %90 {strides = array<i32>} : memref<64x108xf32, #tpu.memory_space<vmem>>, vector<64x4xf32>,
    %c0_136 = arith.constant 0 : index
    %c0_137 = arith.constant 0 : index
    %c1_138 = arith.constant 1 : index
    %c2_139 = arith.constant 2 : index
    %c0_140 = arith.constant 0 : index
    %92 = vector.load %arg4[%c0_136, %c0_137, %c1_138, %c2_139, %c0_140] : memref<1x1x10x10x4xf32, #tpu.memory_space<vmem>>, vector<1x1x8x8x4xf32>
    %93 = vector.shape_cast %92 : vector<1x1x8x8x4xf32> to vector<8x8x4xf32>
    %94 = vector.shape_cast %93 : vector<8x8x4xf32> to vector<64x4xf32>
    %c0_141 = arith.constant 0 : index
    %c92 = arith.constant 92 : index
    %95 = vector.load %arg8[%c0_141, %c92] : memref<64x108xf32, #tpu.memory_space<vmem>>, vector<64x4xf32>
    tpu.vector_store %arg8[%c0_141, %c92], %94 {strides = array<i32>} : memref<64x108xf32, #tpu.memory_space<vmem>>, vector<64x4xf32>,
    %c0_142 = arith.constant 0 : index
    %c0_143 = arith.constant 0 : index
    %c2_144 = arith.constant 2 : index
    %c0_145 = arith.constant 0 : index
    %c0_146 = arith.constant 0 : index
    %96 = vector.load %arg4[%c0_142, %c0_143, %c2_144, %c0_145, %c0_146] : memref<1x1x10x10x4xf32, #tpu.memory_space<vmem>>, vector<1x1x8x8x4xf32>
    %97 = vector.shape_cast %96 : vector<1x1x8x8x4xf32> to vector<8x8x4xf32>
    %98 = vector.shape_cast %97 : vector<8x8x4xf32> to vector<64x4xf32>
    %c0_147 = arith.constant 0 : index
    %c96 = arith.constant 96 : index
    %99 = vector.load %arg8[%c0_147, %c96] : memref<64x108xf32, #tpu.memory_space<vmem>>, vector<64x4xf32>
    tpu.vector_store %arg8[%c0_147, %c96], %98 {strides = array<i32>} : memref<64x108xf32, #tpu.memory_space<vmem>>, vector<64x4xf32>,
    %c0_148 = arith.constant 0 : index
    %c0_149 = arith.constant 0 : index
    %c2_150 = arith.constant 2 : index
    %c1_151 = arith.constant 1 : index
    %c0_152 = arith.constant 0 : index
    %100 = vector.load %arg4[%c0_148, %c0_149, %c2_150, %c1_151, %c0_152] : memref<1x1x10x10x4xf32, #tpu.memory_space<vmem>>, vector<1x1x8x8x4xf32>
    %101 = vector.shape_cast %100 : vector<1x1x8x8x4xf32> to vector<8x8x4xf32>
    %102 = vector.shape_cast %101 : vector<8x8x4xf32> to vector<64x4xf32>
    %c0_153 = arith.constant 0 : index
    %c100 = arith.constant 100 : index
    %103 = vector.load %arg8[%c0_153, %c100] : memref<64x108xf32, #tpu.memory_space<vmem>>, vector<64x4xf32>
    tpu.vector_store %arg8[%c0_153, %c100], %102 {strides = array<i32>} : memref<64x108xf32, #tpu.memory_space<vmem>>, vector<64x4xf32>,
    %c0_154 = arith.constant 0 : index
    %c0_155 = arith.constant 0 : index
    %c2_156 = arith.constant 2 : index
    %c2_157 = arith.constant 2 : index
    %c0_158 = arith.constant 0 : index
    %104 = vector.load %arg4[%c0_154, %c0_155, %c2_156, %c2_157, %c0_158] : memref<1x1x10x10x4xf32, #tpu.memory_space<vmem>>, vector<1x1x8x8x4xf32>
    %105 = vector.shape_cast %104 : vector<1x1x8x8x4xf32> to vector<8x8x4xf32>
    %106 = vector.shape_cast %105 : vector<8x8x4xf32> to vector<64x4xf32>
    %c0_159 = arith.constant 0 : index
    %c104 = arith.constant 104 : index
    %107 = vector.load %arg8[%c0_159, %c104] : memref<64x108xf32, #tpu.memory_space<vmem>>, vector<64x4xf32>
    tpu.vector_store %arg8[%c0_159, %c104], %106 {strides = array<i32>} : memref<64x108xf32, #tpu.memory_space<vmem>>, vector<64x4xf32>,
    %c0_160 = arith.constant 0 : index
    %c0_161 = arith.constant 0 : index
    %108 = vector.load %arg8[%c0_160, %c0_161] : memref<64x108xf32, #tpu.memory_space<vmem>>, vector<64x108xf32>
    %109 = arith.truncf %108 : vector<64x108xf32> to vector<64x108xbf16>
    %c0_162 = arith.constant 0 : index
    %c0_163 = arith.constant 0 : index
    %110 = vector.load %arg5[%c0_162, %c0_163] : memref<108x32xbf16, #tpu.memory_space<vmem>>, vector<108x32xbf16>
    %cst = arith.constant dense<0.000000e+00> : vector<64x32xf32>
    %111 = tpu.matmul %109, %110, %cst {dimension_numbers = #tpu.dot_dimension_numbers<[1], [0], [0], [1], [0, 0, 1, 1], [], []>} : vector<64x108xbf16>, vector<108x32xbf16>, vector<64x32xf32> -> vector<64x32xf32>
    %c0_164 = arith.constant 0 : index
    %c0_165 = arith.constant 0 : index
    %112 = vector.load %arg6[%c0_164, %c0_165] : memref<1x32xf32, #tpu.memory_space<vmem>>, vector<1x32xf32>
    %113 = vector.broadcast %112 : vector<1x32xf32> to vector<64x32xf32>
    %114 = arith.addf %111, %113 : vector<64x32xf32>
    %cst_166 = arith.constant 0.000000e+00 : f32
    %115 = vector.broadcast %cst_166 : f32 to vector<64x32xf32>
    %116 = arith.cmpf ogt, %114, %115 : vector<64x32xf32>
    %cst_167 = arith.constant 2.000000e-01 : f32
    %117 = vector.broadcast %cst_167 : f32 to vector<64x32xf32>
    %118 = arith.mulf %117, %114 : vector<64x32xf32>
    %119 = arith.select %116, %114, %118 : vector<64x32xi1>, vector<64x32xf32>
    %c0_168 = arith.constant 0 : index
    %c0_169 = arith.constant 0 : index
    %c0_170 = arith.constant 0 : index
    %c0_171 = arith.constant 0 : index
    %120 = vector.load %arg7[%c0_168, %c0_169, %c0_170, %c0_171] : memref<1x1x64x32xf32, #tpu.memory_space<vmem>>, vector<1x1x64x32xf32>
    %121 = vector.shape_cast %120 : vector<1x1x64x32xf32> to vector<64x32xf32>
    %122 = vector.shape_cast %119 : vector<64x32xf32> to vector<1x1x64x32xf32>
    tpu.vector_store %arg7[%c0_168, %c0_169, %c0_170, %c0_171], %122 {strides = array<i32>} : memref<1x1x64x32xf32, #tpu.memory_space<vmem>>, vector<1x1x64x32xf32>,
    return
  }
  func.func @transform_0(%arg0: i32, %arg1: i32) -> (i32, i32, i32, i32, i32) {
    %c0_i32 = arith.constant 0 : i32
    %0 = arith.addi %arg1, %c0_i32 : i32
    %c0_i32_0 = arith.constant 0 : i32
    %c0_i32_1 = arith.constant 0 : i32
    %c0_i32_2 = arith.constant 0 : i32
    %c0_i32_3 = arith.constant 0 : i32
    return %arg0, %0, %c0_i32_0, %c0_i32_1, %c0_i32_2 : i32, i32, i32, i32, i32
  }
  func.func @transform_1(%arg0: i32, %arg1: i32) -> (i32, i32, i32, i32, i32) {
    %c1_i32 = arith.constant 1 : i32
    %0 = arith.addi %arg1, %c1_i32 : i32
    %c0_i32 = arith.constant 0 : i32
    %c0_i32_0 = arith.constant 0 : i32
    %c0_i32_1 = arith.constant 0 : i32
    %c0_i32_2 = arith.constant 0 : i32
    return %arg0, %0, %c0_i32, %c0_i32_0, %c0_i32_1 : i32, i32, i32, i32, i32
  }
  func.func @transform_2(%arg0: i32, %arg1: i32) -> (i32, i32, i32, i32, i32) {
    %c2_i32 = arith.constant 2 : i32
    %0 = arith.addi %arg1, %c2_i32 : i32
    %c0_i32 = arith.constant 0 : i32
    %c0_i32_0 = arith.constant 0 : i32
    %c0_i32_1 = arith.constant 0 : i32
    %c0_i32_2 = arith.constant 0 : i32
    return %arg0, %0, %c0_i32, %c0_i32_0, %c0_i32_1 : i32, i32, i32, i32, i32
  }
  func.func @transform_3(%arg0: i32, %arg1: i32) -> (i32, i32) {
    %c0_i32 = arith.constant 0 : i32
    %c0_i32_0 = arith.constant 0 : i32
    %c0_i32_1 = arith.constant 0 : i32
    return %c0_i32, %c0_i32_0 : i32, i32
  }
  func.func @transform_4(%arg0: i32, %arg1: i32) -> (i32, i32) {
    %c0_i32 = arith.constant 0 : i32
    %c0_i32_0 = arith.constant 0 : i32
    %c0_i32_1 = arith.constant 0 : i32
    return %c0_i32, %c0_i32_0 : i32, i32
  }
  func.func @transform_5(%arg0: i32, %arg1: i32) -> (i32, i32, i32, i32) {
    %c0_i32 = arith.constant 0 : i32
    %c0_i32_0 = arith.constant 0 : i32
    %c0_i32_1 = arith.constant 0 : i32
    return %arg0, %arg1, %c0_i32, %c0_i32_0 : i32, i32, i32, i32
  }
}

</mosaic_0001>

<llo_original>
// kernel: tpu_custom_call.1
$region0: #{tpu_custom_call.1}
  #allocation0 [shape = 'u32[]', space=smem, size = 0x4, offset = 0x4, fixed_abs, tag = 'smem constant byte address 0x4 - core index']
  #allocation1 [shape = 'u32[144,128]{1,0:T(1,128)}', space=vmem, size = 0x12000, scoped, tag = 'internal scratch']
  #allocation2 [shape = 'f32[64,108]{1,0:T(8,128)}', space=vmem, size = 0x8000, scoped, tag = 'scratch operand']
  %s0 = inlined_call_operand.vmem [shape: f32[2,5,10,10,4], index: 0, kind: input, shape index: {}]
  %s1 = inlined_call_operand.vmem [shape: f32[2,5,10,10,4], index: 1, kind: input, shape index: {}]
  %s2 = inlined_call_operand.vmem [shape: f32[2,5,10,10,4], index: 2, kind: input, shape index: {}]
  %s3 = inlined_call_operand.vmem [shape: bf16[108,32], index: 3, kind: input, shape index: {}]
  %s4 = inlined_call_operand.vmem [shape: f32[1,32], index: 4, kind: input, shape index: {}]
  %s5 = inlined_call_operand.vmem [shape: f32[2,3,64,32], index: 5, kind: output, shape index: {}]
  %s6 = sld [smem:[#allocation0]]
  $region53: #{tpu_custom_call.1} parent=0
    _
  %s8 = ssub.s32 1, %s6
  %s9 = scalar_select 0, %s8, %s6
  loop: start=0, step=1, limit=8
  $region2: #{tpu_custom_call.1} parent=0 // loop_pre_header
    _
  $region3: #{tpu_custom_call.1} parent=0 // loop_header
    %s11 = sphi 0, %s15
    %p12 = scmp.ge.s32.totalorder %s11, 8
    %s18 = sphi 0, %s30
    %s19 = sphi 0, %s26
    %s20 = sphi 0, %s18
    %s21 = sphi 0, %s19
    %s22 = sphi 0, %s20
    %s23 = sphi 0, %s21
    %s35 = sphi 0, %s37
    %s38 = sphi 0, %s35
    %s39 = sphi 0, %s38
    %s55 = sphi 0, %s39
    %s65 = sphi 0, %s67
    %s68 = sphi 0, %s65
    %s69 = sphi 0, %s68
    %s85 = sphi 0, %s69
    %s95 = sphi 0, %s97
    %s98 = sphi 0, %s95
    %s99 = sphi 0, %s98
    %s115 = sphi 0, %s99
    %s119 = sphi 0, %s119
    %s121 = sphi 0, %s119
    %s122 = sphi 0, %s121
    %s136 = sphi 0, %s122
    %s140 = sphi 0, %s140
    %s142 = sphi 0, %s140
    %s143 = sphi 0, %s142
    %s157 = sphi 0, %s143
    %s165 = sphi 0, %s167
    %s168 = sphi 0, %s165
    %s169 = sphi 0, %s168
    %s185 = sphi 0, %s169
  $region4: #{tpu_custom_call.1} parent=0 // loop_header_branch
    %14 = sbr.rel (%p12) target = $region8
  $region5: #{tpu_custom_call.1} parent=0 // loop_body
    %s16 = ssub.s32 %s11, 1
    %s17 = ssub.s32 %s11, 2
    %s24 = sadd.s32 1, %s19
    %p25 = scmp.ge.s32.totalorder %s24, 3
    %s26 = scalar_select %p25, 0, %s24
    %s27 = sadd.s32 1, %s18
    %s28 = scalar_select %p25, %s27, %s18
    %p29 = scmp.ge.s32.totalorder %s28, 2
    %s30 = scalar_select %p29, 0, %s28
    %s31 = ssub.s32 %s18, %s30
    %s32 = ssub.s32 %s19, %s26
    %s33 = sor.u32 %s31, %s32
    %p34 = scmp.eq.s32.totalorder %s33, 0
    %s36 = sadd.s32 %s35, 1
    %s37 = scalar_select %p34, %s35, %s36
    %p40 = pneg %p34
    %p41 = scmp.eq.s32.totalorder %s11, 5
    %p42 = por %p40, %p41
    %p43 = scmp.ne.s32.totalorder %s35, %s38
    %p44 = scmp.eq.s32.totalorder %s11, 0
    %p45 = por %p43, %p44
    %p46 = scmp.ne.s32.totalorder %s35, %s38
    %p47 = scmp.eq.s32.totalorder %s16, 5
    %p48 = por %p46, %p47
    %p49 = scmp.ne.s32.totalorder %s38, %s39
    %p50 = scmp.eq.s32.totalorder %s16, 0
    %p51 = por %p49, %p50
    %p52 = scmp.ne.s32.totalorder %s38, %s39
    %p53 = scmp.eq.s32.totalorder %s17, 5
    %p54 = por %p52, %p53
    %p56 = scmp.ne.s32.totalorder %s39, %s55
    %p57 = scmp.eq.s32.totalorder %s17, 0
    %p58 = por %p56, %p57
    %s59 = sadd.s32 %s19, 1
    %s60 = sadd.s32 %s26, 1
    %s61 = ssub.s32 %s18, %s30
    %s62 = ssub.s32 %s59, %s60
    %s63 = sor.u32 %s61, %s62
    %p64 = scmp.eq.s32.totalorder %s63, 0
    %s66 = sadd.s32 %s65, 1
    %s67 = scalar_select %p64, %s65, %s66
    %p70 = pneg %p64
    %p71 = scmp.eq.s32.totalorder %s11, 5
    %p72 = por %p70, %p71
    %p73 = scmp.ne.s32.totalorder %s65, %s68
    %p74 = scmp.eq.s32.totalorder %s11, 0
    %p75 = por %p73, %p74
    %p76 = scmp.ne.s32.totalorder %s65, %s68
    %p77 = scmp.eq.s32.totalorder %s16, 5
    %p78 = por %p76, %p77
    %p79 = scmp.ne.s32.totalorder %s68, %s69
    %p80 = scmp.eq.s32.totalorder %s16, 0
    %p81 = por %p79, %p80
    %p82 = scmp.ne.s32.totalorder %s68, %s69
    %p83 = scmp.eq.s32.totalorder %s17, 5
    %p84 = por %p82, %p83
    %p86 = scmp.ne.s32.totalorder %s69, %s85
    %p87 = scmp.eq.s32.totalorder %s17, 0
    %p88 = por %p86, %p87
    %s89 = sadd.s32 %s19, 2
    %s90 = sadd.s32 %s26, 2
    %s91 = ssub.s32 %s18, %s30
    %s92 = ssub.s32 %s89, %s90
    %s93 = sor.u32 %s91, %s92
    %p94 = scmp.eq.s32.totalorder %s93, 0
    %s96 = sadd.s32 %s95, 1
    %s97 = scalar_select %p94, %s95, %s96
    %p100 = pneg %p94
    %p101 = scmp.eq.s32.totalorder %s11, 5
    %p102 = por %p100, %p101
    %p103 = scmp.ne.s32.totalorder %s95, %s98
    %p104 = scmp.eq.s32.totalorder %s11, 0
    %p105 = por %p103, %p104
    %p106 = scmp.ne.s32.totalorder %s95, %s98
    %p107 = scmp.eq.s32.totalorder %s16, 5
    %p108 = por %p106, %p107
    %p109 = scmp.ne.s32.totalorder %s98, %s99
    %p110 = scmp.eq.s32.totalorder %s16, 0
    %p111 = por %p109, %p110
    %p112 = scmp.ne.s32.totalorder %s98, %s99
    %p113 = scmp.eq.s32.totalorder %s17, 5
    %p114 = por %p112, %p113
    %p116 = scmp.ne.s32.totalorder %s99, %s115
    %p117 = scmp.eq.s32.totalorder %s17, 0
    %p118 = por %p116, %p117
    %s120 = sadd.s32 %s119, 1
    %p123 = scmp.eq.s32.totalorder %s11, 5
    %p124 = scmp.ne.s32.totalorder %s119, %s121
    %p125 = scmp.eq.s32.totalorder %s11, 0
    %p126 = por %p124, %p125
    %p127 = scmp.ne.s32.totalorder %s119, %s121
    %p128 = scmp.eq.s32.totalorder %s16, 5
    %p129 = por %p127, %p128
    %p130 = scmp.ne.s32.totalorder %s121, %s122
    %p131 = scmp.eq.s32.totalorder %s16, 0
    %p132 = por %p130, %p131
    %p133 = scmp.ne.s32.totalorder %s121, %s122
    %p134 = scmp.eq.s32.totalorder %s17, 5
    %p135 = por %p133, %p134
    %p137 = scmp.ne.s32.totalorder %s122, %s136
    %p138 = scmp.eq.s32.totalorder %s17, 0
    %p139 = por %p137, %p138
    %s141 = sadd.s32 %s140, 1
    %p144 = scmp.eq.s32.totalorder %s11, 5
    %p145 = scmp.ne.s32.totalorder %s140, %s142
    %p146 = scmp.eq.s32.totalorder %s11, 0
    %p147 = por %p145, %p146
    %p148 = scmp.ne.s32.totalorder %s140, %s142
    %p149 = scmp.eq.s32.totalorder %s16, 5
    %p150 = por %p148, %p149
    %p151 = scmp.ne.s32.totalorder %s142, %s143
    %p152 = scmp.eq.s32.totalorder %s16, 0
    %p153 = por %p151, %p152
    %p154 = scmp.ne.s32.totalorder %s142, %s143
    %p155 = scmp.eq.s32.totalorder %s17, 5
    %p156 = por %p154, %p155
    %p158 = scmp.ne.s32.totalorder %s143, %s157
    %p159 = scmp.eq.s32.totalorder %s17, 0
    %p160 = por %p158, %p159
    %s161 = ssub.s32 %s18, %s30
    %s162 = ssub.s32 %s19, %s26
    %s163 = sor.u32 %s161, %s162
    %p164 = scmp.eq.s32.totalorder %s163, 0
    %s166 = sadd.s32 %s165, 1
    %s167 = scalar_select %p164, %s165, %s166
    %p170 = pneg %p164
    %p171 = scmp.eq.s32.totalorder %s11, 5
    %p172 = por %p170, %p171
    %p173 = scmp.ne.s32.totalorder %s165, %s168
    %p174 = scmp.eq.s32.totalorder %s11, 0
    %p175 = por %p173, %p174
    %p176 = scmp.ne.s32.totalorder %s165, %s168
    %p177 = scmp.eq.s32.totalorder %s16, 5
    %p178 = por %p176, %p177
    %p179 = scmp.ne.s32.totalorder %s168, %s169
    %p180 = scmp.eq.s32.totalorder %s16, 0
    %p181 = por %p179, %p180
    %p182 = scmp.ne.s32.totalorder %s168, %s169
    %p183 = scmp.eq.s32.totalorder %s17, 5
    %p184 = por %p182, %p183
    %p186 = scmp.ne.s32.totalorder %s169, %s185
    %p187 = scmp.eq.s32.totalorder %s17, 0
    %p188 = por %p186, %p187
    %p189 = scmp.le.s32.totalorder 1, %s11
    %p190 = scmp.lt.s32.totalorder %s11, 7
    %p191 = pnand %p189, %p190
    %p192 = pneg %p191
    // Predicated region
    $region9: #{tpu_custom_call.1} parent=5 // pred_check
      _
    $region10: #{tpu_custom_call.1} parent=5 // pred_check_branch
      %194 = sbr.rel (%p191) target = $region12
    $region11: #{tpu_custom_call.1} parent=5 // pred_region
      %s195 = ssub.s32 %s11, 1
      // Predicated region
      $region13: #{tpu_custom_call.1} parent=11 // pred_check
        %p196 = pneg %p132
      $region14: #{tpu_custom_call.1} parent=11 // pred_check_branch
        %198 = sbr.rel (%p196) target = $region16
      $region15: #{tpu_custom_call.1} parent=11 // pred_region
        _
      $region16: #{tpu_custom_call.1} parent=11 // pred_fallthru
        _
      // Predicated region
      $region17: #{tpu_custom_call.1} parent=11 // pred_check
        %p199 = pneg %p153
      $region18: #{tpu_custom_call.1} parent=11 // pred_check_branch
        %201 = sbr.rel (%p199) target = $region20
      $region19: #{tpu_custom_call.1} parent=11 // pred_region
        _
      $region20: #{tpu_custom_call.1} parent=11 // pred_fallthru
        _
    $region12: #{tpu_custom_call.1} parent=5 // pred_fallthru
      _
    %p202 = scmp.lt.s32.totalorder %s11, 6
    // Predicated region
    $region21: #{tpu_custom_call.1} parent=5 // pred_check
      %p203 = pneg %p202
    $region22: #{tpu_custom_call.1} parent=5 // pred_check_branch
      %205 = sbr.rel (%p203) target = $region24
    $region23: #{tpu_custom_call.1} parent=5 // pred_region
      // Predicated region
      $region25: #{tpu_custom_call.1} parent=23 // pred_check
        %p206 = pneg %p45
      $region26: #{tpu_custom_call.1} parent=23 // pred_check_branch
        %208 = sbr.rel (%p206) target = $region28
      $region27: #{tpu_custom_call.1} parent=23 // pred_region
        %p209 = scmp.lt.s32.totalorder %s18, 1
        %s210 = scalar_select %p209, %s18, 1
        %p211 = scmp.lt.s32.totalorder %s19, 4
        %s212 = scalar_select %p211, %s19, 4
        %s213 = smul.addr %s212, 20
        %s214 = smul.addr %s210, 100
        %s215 = sadd.s32 %s213, %s214
        %s216 = smul.addr %s215, 8
        %s217 = scalar_lea.vmem %s0, %s216
      $region28: #{tpu_custom_call.1} parent=23 // pred_fallthru
        _
      // Predicated region
      $region29: #{tpu_custom_call.1} parent=23 // pred_check
        %p218 = pneg %p75
      $region30: #{tpu_custom_call.1} parent=23 // pred_check_branch
        %220 = sbr.rel (%p218) target = $region32
      $region31: #{tpu_custom_call.1} parent=23 // pred_region
        %s221 = sadd.s32 %s19, 1
        %p222 = scmp.lt.s32.totalorder %s18, 1
        %s223 = scalar_select %p222, %s18, 1
        %p224 = scmp.lt.s32.totalorder %s221, 4
        %s225 = scalar_select %p224, %s221, 4
        %s226 = smul.addr %s225, 20
        %s227 = smul.addr %s223, 100
        %s228 = sadd.s32 %s226, %s227
        %s229 = smul.addr %s228, 8
        %s230 = scalar_lea.vmem %s1, %s229
        %s231 = sadd.s32 %s19, 1
      $region32: #{tpu_custom_call.1} parent=23 // pred_fallthru
        _
      // Predicated region
      $region33: #{tpu_custom_call.1} parent=23 // pred_check
        %p232 = pneg %p105
      $region34: #{tpu_custom_call.1} parent=23 // pred_check_branch
        %234 = sbr.rel (%p232) target = $region36
      $region35: #{tpu_custom_call.1} parent=23 // pred_region
        %s235 = sadd.s32 %s19, 2
        %p236 = scmp.lt.s32.totalorder %s18, 1
        %s237 = scalar_select %p236, %s18, 1
        %p238 = scmp.lt.s32.totalorder %s235, 4
        %s239 = scalar_select %p238, %s235, 4
        %s240 = smul.addr %s239, 20
        %s241 = smul.addr %s237, 100
        %s242 = sadd.s32 %s240, %s241
        %s243 = smul.addr %s242, 8
        %s244 = scalar_lea.vmem %s2, %s243
        %s245 = sadd.s32 %s19, 2
      $region36: #{tpu_custom_call.1} parent=23 // pred_fallthru
        _
    $region24: #{tpu_custom_call.1} parent=5 // pred_fallthru
      _
    %p246 = scmp.le.s32.totalorder 1, %s11
    %p247 = scmp.lt.s32.totalorder %s11, 7
    %p248 = pnand %p246, %p247
    %p249 = pneg %p248
    // Predicated region
    $region37: #{tpu_custom_call.1} parent=5 // pred_check
      _
    $region38: #{tpu_custom_call.1} parent=5 // pred_check_branch
      %251 = sbr.rel (%p248) target = $region40
    $region39: #{tpu_custom_call.1} parent=5 // pred_region
      %s252 = ssub.s32 %s11, 1
      %p253 = scmp.lt.s32.totalorder %s20, 1
      %s254 = scalar_select %p253, %s20, 1
      %p255 = scmp.lt.s32.totalorder %s21, 4
      %s256 = scalar_select %p255, %s21, 4
      %s257 = smul.addr %s256, 20
      %s258 = smul.addr %s254, 100
      %s259 = sadd.s32 %s257, %s258
      %s260 = smul.addr %s259, 8
      %s261 = scalar_lea.vmem %s0, %s260
      %p262 = pneg %p51
      %p263 = pneg %p48
      %s264 = sadd.s32 %s21, 1
      %p265 = scmp.lt.s32.totalorder %s20, 1
      %s266 = scalar_select %p265, %s20, 1
      %p267 = scmp.lt.s32.totalorder %s264, 4
      %s268 = scalar_select %p267, %s264, 4
      %s269 = smul.addr %s268, 20
      %s270 = smul.addr %s266, 100
      %s271 = sadd.s32 %s269, %s270
      %s272 = smul.addr %s271, 8
      %s273 = scalar_lea.vmem %s1, %s272
      %p274 = pneg %p81
      %p275 = pneg %p78
      %s276 = sadd.s32 %s21, 2
      %p277 = scmp.lt.s32.totalorder %s20, 1
      %s278 = scalar_select %p277, %s20, 1
      %p279 = scmp.lt.s32.totalorder %s276, 4
      %s280 = scalar_select %p279, %s276, 4
      %s281 = smul.addr %s280, 20
      %s282 = smul.addr %s278, 100
      %s283 = sadd.s32 %s281, %s282
      %s284 = smul.addr %s283, 8
      %s285 = scalar_lea.vmem %s2, %s284
      %p286 = pneg %p111
      %p287 = pneg %p108
      %p288 = pneg %p132
      %p289 = pneg %p129
      %p290 = pneg %p153
      %p291 = pneg %p150
      %p292 = pneg %p181
      %p293 = pneg %p178
      %p294 = scmp.lt.s32.totalorder %s20, 1
      %s295 = scalar_select %p294, %s20, 1
      %p296 = scmp.lt.s32.totalorder %s21, 2
      %s297 = scalar_select %p296, %s21, 2
      %s298 = smul.addr %s297, 8
      %s299 = smul.addr %s295, 24
      %s300 = sadd.s32 %s298, %s299
      %s301 = smul.addr %s300, 8
      %s302 = scalar_lea.vmem %s5, %s301
      %p303 = scmp.lt.s32.totalorder %s20, 1
      %s304 = scalar_select %p303, %s20, 1
      %p305 = scmp.lt.s32.totalorder %s21, 4
      %s306 = scalar_select %p305, %s21, 4
      %s307 = smul.addr %s306, 20
      %s308 = smul.addr %s304, 100
      %s309 = sadd.s32 %s307, %s308
      %s310 = smul.addr %s309, 8
      %s311 = scalar_lea.vmem %s0, %s310
      %s312 = sadd.s32 %s21, 1
      %p313 = scmp.lt.s32.totalorder %s20, 1
      %s314 = scalar_select %p313, %s20, 1
      %p315 = scmp.lt.s32.totalorder %s312, 4
      %s316 = scalar_select %p315, %s312, 4
      %s317 = smul.addr %s316, 20
      %s318 = smul.addr %s314, 100
      %s319 = sadd.s32 %s317, %s318
      %s320 = smul.addr %s319, 8
      %s321 = scalar_lea.vmem %s1, %s320
      %s322 = sadd.s32 %s21, 1
      %s323 = sadd.s32 %s21, 2
      %p324 = scmp.lt.s32.totalorder %s20, 1
      %s325 = scalar_select %p324, %s20, 1
      %p326 = scmp.lt.s32.totalorder %s323, 4
      %s327 = scalar_select %p326, %s323, 4
      %s328 = smul.addr %s327, 20
      %s329 = smul.addr %s325, 100
      %s330 = sadd.s32 %s328, %s329
      %s331 = smul.addr %s330, 8
      %s332 = scalar_lea.vmem %s2, %s331
      %s333 = sadd.s32 %s21, 2
      %p334 = scmp.lt.s32.totalorder %s20, 1
      %s335 = scalar_select %p334, %s20, 1
      %p336 = scmp.lt.s32.totalorder %s21, 2
      %s337 = scalar_select %p336, %s21, 2
      %s338 = smul.addr %s337, 8
      %s339 = smul.addr %s335, 24
      %s340 = sadd.s32 %s338, %s339
      %s341 = smul.addr %s340, 8
      %s342 = scalar_lea.vmem %s5, %s341
      %v344 = vld [vmem:[%s311] sm:$0xff]
      %v345 = vld [vmem:[%s311 + $0x10] sm:$0xff]
      %v346 = vld [vmem:[%s311 + $0x20] sm:$0xff]
      %v347 = vld [vmem:[%s311 + $0x30] sm:$0xff]
      %v348 = vld [vmem:[%s311 + $0x40] sm:$0xff]
      %v349 = vld [vmem:[%s311 + $0x50] sm:$0xff]
      %v350 = vld [vmem:[%s311 + $0x60] sm:$0xff]
      %v351 = vld [vmem:[%s311 + $0x70] sm:$0xff]
      %vm352 = vcmask 31744
      %353 = vst.msk [vmem:[#allocation2] sm:$0xff] %vm352, %v344
      %354 = vst.msk [vmem:[#allocation2 + $0x8] sm:$0xff] %vm352, %v345
      %355 = vst.msk [vmem:[#allocation2 + $0x10] sm:$0xff] %vm352, %v346
      %356 = vst.msk [vmem:[#allocation2 + $0x18] sm:$0xff] %vm352, %v347
      %357 = vst.msk [vmem:[#allocation2 + $0x20] sm:$0xff] %vm352, %v348
      %358 = vst.msk [vmem:[#allocation2 + $0x28] sm:$0xff] %vm352, %v349
      %359 = vst.msk [vmem:[#allocation2 + $0x30] sm:$0xff] %vm352, %v350
      %360 = vst.msk [vmem:[#allocation2 + $0x38] sm:$0xff] %vm352, %v351
      %v361 = vld [vmem:[%s311 + $0x1] sm:$0xff]
      %v362 = vld [vmem:[%s311 + $0x11] sm:$0xff]
      %v363 = vld [vmem:[%s311 + $0x21] sm:$0xff]
      %v364 = vld [vmem:[%s311 + $0x31] sm:$0xff]
      %v365 = vld [vmem:[%s311 + $0x41] sm:$0xff]
      %v366 = vld [vmem:[%s311 + $0x51] sm:$0xff]
      %v367 = vld [vmem:[%s311 + $0x61] sm:$0xff]
      %v368 = vld [vmem:[%s311 + $0x71] sm:$0xff]
      %377 = vrot.lane.b32.xlu0 %v361, 4
      %v378 = vpop.permute.xlu0 %377
      %379 = vrot.lane.b32.xlu0 %v362, 4
      %v380 = vpop.permute.xlu0 %379
      %381 = vrot.lane.b32.xlu0 %v363, 4
      %v382 = vpop.permute.xlu0 %381
      %383 = vrot.lane.b32.xlu0 %v364, 4
      %v384 = vpop.permute.xlu0 %383
      %385 = vrot.lane.b32.xlu0 %v365, 4
      %v386 = vpop.permute.xlu0 %385
      %387 = vrot.lane.b32.xlu0 %v366, 4
      %v388 = vpop.permute.xlu0 %387
      %389 = vrot.lane.b32.xlu0 %v367, 4
      %v390 = vpop.permute.xlu0 %389
      %391 = vrot.lane.b32.xlu0 %v368, 4
      %v392 = vpop.permute.xlu0 %391
      %vm401 = vcmask 64544
      %402 = vst.msk [vmem:[#allocation2] sm:$0xff] %vm401, %v378
      %403 = vst.msk [vmem:[#allocation2 + $0x8] sm:$0xff] %vm401, %v380
      %404 = vst.msk [vmem:[#allocation2 + $0x10] sm:$0xff] %vm401, %v382
      %405 = vst.msk [vmem:[#allocation2 + $0x18] sm:$0xff] %vm401, %v384
      %406 = vst.msk [vmem:[#allocation2 + $0x20] sm:$0xff] %vm401, %v386
      %407 = vst.msk [vmem:[#allocation2 + $0x28] sm:$0xff] %vm401, %v388
      %408 = vst.msk [vmem:[#allocation2 + $0x30] sm:$0xff] %vm401, %v390
      %409 = vst.msk [vmem:[#allocation2 + $0x38] sm:$0xff] %vm401, %v392
      %v410 = vld [vmem:[%s311 + $0x2] sm:$0xff]
      %v411 = vld [vmem:[%s311 + $0x12] sm:$0xff]
      %v412 = vld [vmem:[%s311 + $0x22] sm:$0xff]
      %v413 = vld [vmem:[%s311 + $0x32] sm:$0xff]
      %v414 = vld [vmem:[%s311 + $0x42] sm:$0xff]
      %v415 = vld [vmem:[%s311 + $0x52] sm:$0xff]
      %v416 = vld [vmem:[%s311 + $0x62] sm:$0xff]
      %v417 = vld [vmem:[%s311 + $0x72] sm:$0xff]
      %426 = vrot.lane.b32.xlu0 %v410, 8
      %v427 = vpop.permute.xlu0 %426
      %428 = vrot.lane.b32.xlu0 %v411, 8
      %v429 = vpop.permute.xlu0 %428
      %430 = vrot.lane.b32.xlu0 %v412, 8
      %v431 = vpop.permute.xlu0 %430
      %432 = vrot.lane.b32.xlu0 %v413, 8
      %v433 = vpop.permute.xlu0 %432
      %434 = vrot.lane.b32.xlu0 %v414, 8
      %v435 = vpop.permute.xlu0 %434
      %436 = vrot.lane.b32.xlu0 %v415, 8
      %v437 = vpop.permute.xlu0 %436
      %438 = vrot.lane.b32.xlu0 %v416, 8
      %v439 = vpop.permute.xlu0 %438
      %440 = vrot.lane.b32.xlu0 %v417, 8
      %v441 = vpop.permute.xlu0 %440
      %vm450 = vcmask 97344
      %451 = vst.msk [vmem:[#allocation2] sm:$0xff] %vm450, %v427
      %452 = vst.msk [vmem:[#allocation2 + $0x8] sm:$0xff] %vm450, %v429
      %453 = vst.msk [vmem:[#allocation2 + $0x10] sm:$0xff] %vm450, %v431
      %454 = vst.msk [vmem:[#allocation2 + $0x18] sm:$0xff] %vm450, %v433
      %455 = vst.msk [vmem:[#allocation2 + $0x20] sm:$0xff] %vm450, %v435
      %456 = vst.msk [vmem:[#allocation2 + $0x28] sm:$0xff] %vm450, %v437
      %457 = vst.msk [vmem:[#allocation2 + $0x30] sm:$0xff] %vm450, %v439
      %458 = vst.msk [vmem:[#allocation2 + $0x38] sm:$0xff] %vm450, %v441
      %s459 = scalar_lea.vmem %s311, 16
      %v460 = vld [vmem:[%s459] sm:$0xff]
      %v461 = vld [vmem:[%s459 + $0x10] sm:$0xff]
      %v462 = vld [vmem:[%s459 + $0x20] sm:$0xff]
      %v463 = vld [vmem:[%s459 + $0x30] sm:$0xff]
      %v464 = vld [vmem:[%s459 + $0x40] sm:$0xff]
      %v465 = vld [vmem:[%s459 + $0x50] sm:$0xff]
      %v466 = vld [vmem:[%s459 + $0x60] sm:$0xff]
      %v467 = vld [vmem:[%s459 + $0x70] sm:$0xff]
      %476 = vrot.lane.b32.xlu0 %v460, 12
      %v477 = vpop.permute.xlu0 %476
      %478 = vrot.lane.b32.xlu0 %v461, 12
      %v479 = vpop.permute.xlu0 %478
      %480 = vrot.lane.b32.xlu0 %v462, 12
      %v481 = vpop.permute.xlu0 %480
      %482 = vrot.lane.b32.xlu0 %v463, 12
      %v483 = vpop.permute.xlu0 %482
      %484 = vrot.lane.b32.xlu0 %v464, 12
      %v485 = vpop.permute.xlu0 %484
      %486 = vrot.lane.b32.xlu0 %v465, 12
      %v487 = vpop.permute.xlu0 %486
      %488 = vrot.lane.b32.xlu0 %v466, 12
      %v489 = vpop.permute.xlu0 %488
      %490 = vrot.lane.b32.xlu0 %v467, 12
      %v491 = vpop.permute.xlu0 %490
      %vm500 = vcmask 130144
      %501 = vst.msk [vmem:[#allocation2] sm:$0xff] %vm500, %v477
      %502 = vst.msk [vmem:[#allocation2 + $0x8] sm:$0xff] %vm500, %v479
      %503 = vst.msk [vmem:[#allocation2 + $0x10] sm:$0xff] %vm500, %v481
      %504 = vst.msk [vmem:[#allocation2 + $0x18] sm:$0xff] %vm500, %v483
      %505 = vst.msk [vmem:[#allocation2 + $0x20] sm:$0xff] %vm500, %v485
      %506 = vst.msk [vmem:[#allocation2 + $0x28] sm:$0xff] %vm500, %v487
      %507 = vst.msk [vmem:[#allocation2 + $0x30] sm:$0xff] %vm500, %v489
      %508 = vst.msk [vmem:[#allocation2 + $0x38] sm:$0xff] %vm500, %v491
      %v509 = vld [vmem:[%s459 + $0x1] sm:$0xff]
      %v510 = vld [vmem:[%s459 + $0x11] sm:$0xff]
      %v511 = vld [vmem:[%s459 + $0x21] sm:$0xff]
      %v512 = vld [vmem:[%s459 + $0x31] sm:$0xff]
      %v513 = vld [vmem:[%s459 + $0x41] sm:$0xff]
      %v514 = vld [vmem:[%s459 + $0x51] sm:$0xff]
      %v515 = vld [vmem:[%s459 + $0x61] sm:$0xff]
      %v516 = vld [vmem:[%s459 + $0x71] sm:$0xff]
      %525 = vrot.lane.b32.xlu0 %v509, 16
      %v526 = vpop.permute.xlu0 %525
      %527 = vrot.lane.b32.xlu0 %v510, 16
      %v528 = vpop.permute.xlu0 %527
      %529 = vrot.lane.b32.xlu0 %v511, 16
      %v530 = vpop.permute.xlu0 %529
      %531 = vrot.lane.b32.xlu0 %v512, 16
      %v532 = vpop.permute.xlu0 %531
      %533 = vrot.lane.b32.xlu0 %v513, 16
      %v534 = vpop.permute.xlu0 %533
      %535 = vrot.lane.b32.xlu0 %v514, 16
      %v536 = vpop.permute.xlu0 %535
      %537 = vrot.lane.b32.xlu0 %v515, 16
      %v538 = vpop.permute.xlu0 %537
      %539 = vrot.lane.b32.xlu0 %v516, 16
      %v540 = vpop.permute.xlu0 %539
      %vm549 = vcmask 162944
      %550 = vst.msk [vmem:[#allocation2] sm:$0xff] %vm549, %v526
      %551 = vst.msk [vmem:[#allocation2 + $0x8] sm:$0xff] %vm549, %v528
      %552 = vst.msk [vmem:[#allocation2 + $0x10] sm:$0xff] %vm549, %v530
      %553 = vst.msk [vmem:[#allocation2 + $0x18] sm:$0xff] %vm549, %v532
      %554 = vst.msk [vmem:[#allocation2 + $0x20] sm:$0xff] %vm549, %v534
      %555 = vst.msk [vmem:[#allocation2 + $0x28] sm:$0xff] %vm549, %v536
      %556 = vst.msk [vmem:[#allocation2 + $0x30] sm:$0xff] %vm549, %v538
      %557 = vst.msk [vmem:[#allocation2 + $0x38] sm:$0xff] %vm549, %v540
      %v558 = vld [vmem:[%s459 + $0x2] sm:$0xff]
      %v559 = vld [vmem:[%s459 + $0x12] sm:$0xff]
      %v560 = vld [vmem:[%s459 + $0x22] sm:$0xff]
      %v561 = vld [vmem:[%s459 + $0x32] sm:$0xff]
      %v562 = vld [vmem:[%s459 + $0x42] sm:$0xff]
      %v563 = vld [vmem:[%s459 + $0x52] sm:$0xff]
      %v564 = vld [vmem:[%s459 + $0x62] sm:$0xff]
      %v565 = vld [vmem:[%s459 + $0x72] sm:$0xff]
      %574 = vrot.lane.b32.xlu0 %v558, 20
      %v575 = vpop.permute.xlu0 %574
      %576 = vrot.lane.b32.xlu0 %v559, 20
      %v577 = vpop.permute.xlu0 %576
      %578 = vrot.lane.b32.xlu0 %v560, 20
      %v579 = vpop.permute.xlu0 %578
      %580 = vrot.lane.b32.xlu0 %v561, 20
      %v581 = vpop.permute.xlu0 %580
      %582 = vrot.lane.b32.xlu0 %v562, 20
      %v583 = vpop.permute.xlu0 %582
      %584 = vrot.lane.b32.xlu0 %v563, 20
      %v585 = vpop.permute.xlu0 %584
      %586 = vrot.lane.b32.xlu0 %v564, 20
      %v587 = vpop.permute.xlu0 %586
      %588 = vrot.lane.b32.xlu0 %v565, 20
      %v589 = vpop.permute.xlu0 %588
      %vm598 = vcmask 195744
      %599 = vst.msk [vmem:[#allocation2] sm:$0xff] %vm598, %v575
      %600 = vst.msk [vmem:[#allocation2 + $0x8] sm:$0xff] %vm598, %v577
      %601 = vst.msk [vmem:[#allocation2 + $0x10] sm:$0xff] %vm598, %v579
      %602 = vst.msk [vmem:[#allocation2 + $0x18] sm:$0xff] %vm598, %v581
      %603 = vst.msk [vmem:[#allocation2 + $0x20] sm:$0xff] %vm598, %v583
      %604 = vst.msk [vmem:[#allocation2 + $0x28] sm:$0xff] %vm598, %v585
      %605 = vst.msk [vmem:[#allocation2 + $0x30] sm:$0xff] %vm598, %v587
      %606 = vst.msk [vmem:[#allocation2 + $0x38] sm:$0xff] %vm598, %v589
      %s607 = scalar_lea.vmem %s311, 32
      %v608 = vld [vmem:[%s607] sm:$0xff]
      %v609 = vld [vmem:[%s607 + $0x10] sm:$0xff]
      %v610 = vld [vmem:[%s607 + $0x20] sm:$0xff]
      %v611 = vld [vmem:[%s607 + $0x30] sm:$0xff]
      %v612 = vld [vmem:[%s607 + $0x40] sm:$0xff]
      %v613 = vld [vmem:[%s607 + $0x50] sm:$0xff]
      %v614 = vld [vmem:[%s607 + $0x60] sm:$0xff]
      %v615 = vld [vmem:[%s607 + $0x70] sm:$0xff]
      %624 = vrot.lane.b32.xlu0 %v608, 24
      %v625 = vpop.permute.xlu0 %624
      %626 = vrot.lane.b32.xlu0 %v609, 24
      %v627 = vpop.permute.xlu0 %626
      %628 = vrot.lane.b32.xlu0 %v610, 24
      %v629 = vpop.permute.xlu0 %628
      %630 = vrot.lane.b32.xlu0 %v611, 24
      %v631 = vpop.permute.xlu0 %630
      %632 = vrot.lane.b32.xlu0 %v612, 24
      %v633 = vpop.permute.xlu0 %632
      %634 = vrot.lane.b32.xlu0 %v613, 24
      %v635 = vpop.permute.xlu0 %634
      %636 = vrot.lane.b32.xlu0 %v614, 24
      %v637 = vpop.permute.xlu0 %636
      %638 = vrot.lane.b32.xlu0 %v615, 24
      %v639 = vpop.permute.xlu0 %638
      %vm648 = vcmask 228544
      %649 = vst.msk [vmem:[#allocation2] sm:$0xff] %vm648, %v625
      %650 = vst.msk [vmem:[#allocation2 + $0x8] sm:$0xff] %vm648, %v627
      %651 = vst.msk [vmem:[#allocation2 + $0x10] sm:$0xff] %vm648, %v629
      %652 = vst.msk [vmem:[#allocation2 + $0x18] sm:$0xff] %vm648, %v631
      %653 = vst.msk [vmem:[#allocation2 + $0x20] sm:$0xff] %vm648, %v633
      %654 = vst.msk [vmem:[#allocation2 + $0x28] sm:$0xff] %vm648, %v635
      %655 = vst.msk [vmem:[#allocation2 + $0x30] sm:$0xff] %vm648, %v637
      %656 = vst.msk [vmem:[#allocation2 + $0x38] sm:$0xff] %vm648, %v639
      %v657 = vld [vmem:[%s607 + $0x1] sm:$0xff]
      %v658 = vld [vmem:[%s607 + $0x11] sm:$0xff]
      %v659 = vld [vmem:[%s607 + $0x21] sm:$0xff]
      %v660 = vld [vmem:[%s607 + $0x31] sm:$0xff]
      %v661 = vld [vmem:[%s607 + $0x41] sm:$0xff]
      %v662 = vld [vmem:[%s607 + $0x51] sm:$0xff]
      %v663 = vld [vmem:[%s607 + $0x61] sm:$0xff]
      %v664 = vld [vmem:[%s607 + $0x71] sm:$0xff]
      %673 = vrot.lane.b32.xlu0 %v657, 28
      %v674 = vpop.permute.xlu0 %673
      %675 = vrot.lane.b32.xlu0 %v658, 28
      %v676 = vpop.permute.xlu0 %675
      %677 = vrot.lane.b32.xlu0 %v659, 28
      %v678 = vpop.permute.xlu0 %677
      %679 = vrot.lane.b32.xlu0 %v660, 28
      %v680 = vpop.permute.xlu0 %679
      %681 = vrot.lane.b32.xlu0 %v661, 28
      %v682 = vpop.permute.xlu0 %681
      %683 = vrot.lane.b32.xlu0 %v662, 28
      %v684 = vpop.permute.xlu0 %683
      %685 = vrot.lane.b32.xlu0 %v663, 28
      %v686 = vpop.permute.xlu0 %685
      %687 = vrot.lane.b32.xlu0 %v664, 28
      %v688 = vpop.permute.xlu0 %687
      %vm697 = vcmask 261344
      %698 = vst.msk [vmem:[#allocation2] sm:$0xff] %vm697, %v674
      %699 = vst.msk [vmem:[#allocation2 + $0x8] sm:$0xff] %vm697, %v676
      %700 = vst.msk [vmem:[#allocation2 + $0x10] sm:$0xff] %vm697, %v678
      %701 = vst.msk [vmem:[#allocation2 + $0x18] sm:$0xff] %vm697, %v680
      %702 = vst.msk [vmem:[#allocation2 + $0x20] sm:$0xff] %vm697, %v682
      %703 = vst.msk [vmem:[#allocation2 + $0x28] sm:$0xff] %vm697, %v684
      %704 = vst.msk [vmem:[#allocation2 + $0x30] sm:$0xff] %vm697, %v686
      %705 = vst.msk [vmem:[#allocation2 + $0x38] sm:$0xff] %vm697, %v688
      %v706 = vld [vmem:[%s607 + $0x2] sm:$0xff]
      %v707 = vld [vmem:[%s607 + $0x12] sm:$0xff]
      %v708 = vld [vmem:[%s607 + $0x22] sm:$0xff]
      %v709 = vld [vmem:[%s607 + $0x32] sm:$0xff]
      %v710 = vld [vmem:[%s607 + $0x42] sm:$0xff]
      %v711 = vld [vmem:[%s607 + $0x52] sm:$0xff]
      %v712 = vld [vmem:[%s607 + $0x62] sm:$0xff]
      %v713 = vld [vmem:[%s607 + $0x72] sm:$0xff]
      %722 = vrot.lane.b32.xlu0 %v706, 32
      %v723 = vpop.permute.xlu0 %722
      %724 = vrot.lane.b32.xlu0 %v707, 32
      %v725 = vpop.permute.xlu0 %724
      %726 = vrot.lane.b32.xlu0 %v708, 32
      %v727 = vpop.permute.xlu0 %726
      %728 = vrot.lane.b32.xlu0 %v709, 32
      %v729 = vpop.permute.xlu0 %728
      %730 = vrot.lane.b32.xlu0 %v710, 32
      %v731 = vpop.permute.xlu0 %730
      %732 = vrot.lane.b32.xlu0 %v711, 32
      %v733 = vpop.permute.xlu0 %732
      %734 = vrot.lane.b32.xlu0 %v712, 32
      %v735 = vpop.permute.xlu0 %734
      %736 = vrot.lane.b32.xlu0 %v713, 32
      %v737 = vpop.permute.xlu0 %736
      %vm746 = vcmask 294144
      %747 = vst.msk [vmem:[#allocation2] sm:$0xff] %vm746, %v723
      %748 = vst.msk [vmem:[#allocation2 + $0x8] sm:$0xff] %vm746, %v725
      %749 = vst.msk [vmem:[#allocation2 + $0x10] sm:$0xff] %vm746, %v727
      %750 = vst.msk [vmem:[#allocation2 + $0x18] sm:$0xff] %vm746, %v729
      %751 = vst.msk [vmem:[#allocation2 + $0x20] sm:$0xff] %vm746, %v731
      %752 = vst.msk [vmem:[#allocation2 + $0x28] sm:$0xff] %vm746, %v733
      %753 = vst.msk [vmem:[#allocation2 + $0x30] sm:$0xff] %vm746, %v735
      %754 = vst.msk [vmem:[#allocation2 + $0x38] sm:$0xff] %vm746, %v737
      %v755 = vld [vmem:[%s321] sm:$0xff]
      %v756 = vld [vmem:[%s321 + $0x10] sm:$0xff]
      %v757 = vld [vmem:[%s321 + $0x20] sm:$0xff]
      %v758 = vld [vmem:[%s321 + $0x30] sm:$0xff]
      %v759 = vld [vmem:[%s321 + $0x40] sm:$0xff]
      %v760 = vld [vmem:[%s321 + $0x50] sm:$0xff]
      %v761 = vld [vmem:[%s321 + $0x60] sm:$0xff]
      %v762 = vld [vmem:[%s321 + $0x70] sm:$0xff]
      %771 = vrot.lane.b32.xlu0 %v755, 36
      %v772 = vpop.permute.xlu0 %771
      %773 = vrot.lane.b32.xlu0 %v756, 36
      %v774 = vpop.permute.xlu0 %773
      %775 = vrot.lane.b32.xlu0 %v757, 36
      %v776 = vpop.permute.xlu0 %775
      %777 = vrot.lane.b32.xlu0 %v758, 36
      %v778 = vpop.permute.xlu0 %777
      %779 = vrot.lane.b32.xlu0 %v759, 36
      %v780 = vpop.permute.xlu0 %779
      %781 = vrot.lane.b32.xlu0 %v760, 36
      %v782 = vpop.permute.xlu0 %781
      %783 = vrot.lane.b32.xlu0 %v761, 36
      %v784 = vpop.permute.xlu0 %783
      %785 = vrot.lane.b32.xlu0 %v762, 36
      %v786 = vpop.permute.xlu0 %785
      %vm795 = vcmask 326944
      %796 = vst.msk [vmem:[#allocation2] sm:$0xff] %vm795, %v772
      %797 = vst.msk [vmem:[#allocation2 + $0x8] sm:$0xff] %vm795, %v774
      %798 = vst.msk [vmem:[#allocation2 + $0x10] sm:$0xff] %vm795, %v776
      %799 = vst.msk [vmem:[#allocation2 + $0x18] sm:$0xff] %vm795, %v778
      %800 = vst.msk [vmem:[#allocation2 + $0x20] sm:$0xff] %vm795, %v780
      %801 = vst.msk [vmem:[#allocation2 + $0x28] sm:$0xff] %vm795, %v782
      %802 = vst.msk [vmem:[#allocation2 + $0x30] sm:$0xff] %vm795, %v784
      %803 = vst.msk [vmem:[#allocation2 + $0x38] sm:$0xff] %vm795, %v786
      %v804 = vld [vmem:[%s321 + $0x1] sm:$0xff]
      %v805 = vld [vmem:[%s321 + $0x11] sm:$0xff]
      %v806 = vld [vmem:[%s321 + $0x21] sm:$0xff]
      %v807 = vld [vmem:[%s321 + $0x31] sm:$0xff]
      %v808 = vld [vmem:[%s321 + $0x41] sm:$0xff]
      %v809 = vld [vmem:[%s321 + $0x51] sm:$0xff]
      %v810 = vld [vmem:[%s321 + $0x61] sm:$0xff]
      %v811 = vld [vmem:[%s321 + $0x71] sm:$0xff]
      %820 = vrot.lane.b32.xlu0 %v804, 40
      %v821 = vpop.permute.xlu0 %820
      %822 = vrot.lane.b32.xlu0 %v805, 40
      %v823 = vpop.permute.xlu0 %822
      %824 = vrot.lane.b32.xlu0 %v806, 40
      %v825 = vpop.permute.xlu0 %824
      %826 = vrot.lane.b32.xlu0 %v807, 40
      %v827 = vpop.permute.xlu0 %826
      %828 = vrot.lane.b32.xlu0 %v808, 40
      %v829 = vpop.permute.xlu0 %828
      %830 = vrot.lane.b32.xlu0 %v809, 40
      %v831 = vpop.permute.xlu0 %830
      %832 = vrot.lane.b32.xlu0 %v810, 40
      %v833 = vpop.permute.xlu0 %832
      %834 = vrot.lane.b32.xlu0 %v811, 40
      %v835 = vpop.permute.xlu0 %834
      %vm844 = vcmask 359744
      %845 = vst.msk [vmem:[#allocation2] sm:$0xff] %vm844, %v821
      %846 = vst.msk [vmem:[#allocation2 + $0x8] sm:$0xff] %vm844, %v823
      %847 = vst.msk [vmem:[#allocation2 + $0x10] sm:$0xff] %vm844, %v825
      %848 = vst.msk [vmem:[#allocation2 + $0x18] sm:$0xff] %vm844, %v827
      %849 = vst.msk [vmem:[#allocation2 + $0x20] sm:$0xff] %vm844, %v829
      %850 = vst.msk [vmem:[#allocation2 + $0x28] sm:$0xff] %vm844, %v831
      %851 = vst.msk [vmem:[#allocation2 + $0x30] sm:$0xff] %vm844, %v833
      %852 = vst.msk [vmem:[#allocation2 + $0x38] sm:$0xff] %vm844, %v835
      %v853 = vld [vmem:[%s321 + $0x2] sm:$0xff]
      %v854 = vld [vmem:[%s321 + $0x12] sm:$0xff]
      %v855 = vld [vmem:[%s321 + $0x22] sm:$0xff]
      %v856 = vld [vmem:[%s321 + $0x32] sm:$0xff]
      %v857 = vld [vmem:[%s321 + $0x42] sm:$0xff]
      %v858 = vld [vmem:[%s321 + $0x52] sm:$0xff]
      %v859 = vld [vmem:[%s321 + $0x62] sm:$0xff]
      %v860 = vld [vmem:[%s321 + $0x72] sm:$0xff]
      %869 = vrot.lane.b32.xlu0 %v853, 44
      %v870 = vpop.permute.xlu0 %869
      %871 = vrot.lane.b32.xlu0 %v854, 44
      %v872 = vpop.permute.xlu0 %871
      %873 = vrot.lane.b32.xlu0 %v855, 44
      %v874 = vpop.permute.xlu0 %873
      %875 = vrot.lane.b32.xlu0 %v856, 44
      %v876 = vpop.permute.xlu0 %875
      %877 = vrot.lane.b32.xlu0 %v857, 44
      %v878 = vpop.permute.xlu0 %877
      %879 = vrot.lane.b32.xlu0 %v858, 44
      %v880 = vpop.permute.xlu0 %879
      %881 = vrot.lane.b32.xlu0 %v859, 44
      %v882 = vpop.permute.xlu0 %881
      %883 = vrot.lane.b32.xlu0 %v860, 44
      %v884 = vpop.permute.xlu0 %883
      %vm893 = vcmask 392544
      %894 = vst.msk [vmem:[#allocation2] sm:$0xff] %vm893, %v870
      %895 = vst.msk [vmem:[#allocation2 + $0x8] sm:$0xff] %vm893, %v872
      %896 = vst.msk [vmem:[#allocation2 + $0x10] sm:$0xff] %vm893, %v874
      %897 = vst.msk [vmem:[#allocation2 + $0x18] sm:$0xff] %vm893, %v876
      %898 = vst.msk [vmem:[#allocation2 + $0x20] sm:$0xff] %vm893, %v878
      %899 = vst.msk [vmem:[#allocation2 + $0x28] sm:$0xff] %vm893, %v880
      %900 = vst.msk [vmem:[#allocation2 + $0x30] sm:$0xff] %vm893, %v882
      %901 = vst.msk [vmem:[#allocation2 + $0x38] sm:$0xff] %vm893, %v884
      %s902 = scalar_lea.vmem %s321, 16
      %v903 = vld [vmem:[%s902] sm:$0xff]
      %v904 = vld [vmem:[%s902 + $0x10] sm:$0xff]
      %v905 = vld [vmem:[%s902 + $0x20] sm:$0xff]
      %v906 = vld [vmem:[%s902 + $0x30] sm:$0xff]
      %v907 = vld [vmem:[%s902 + $0x40] sm:$0xff]
      %v908 = vld [vmem:[%s902 + $0x50] sm:$0xff]
      %v909 = vld [vmem:[%s902 + $0x60] sm:$0xff]
      %v910 = vld [vmem:[%s902 + $0x70] sm:$0xff]
      %919 = vrot.lane.b32.xlu0 %v903, 48
      %v920 = vpop.permute.xlu0 %919
      %921 = vrot.lane.b32.xlu0 %v904, 48
      %v922 = vpop.permute.xlu0 %921
      %923 = vrot.lane.b32.xlu0 %v905, 48
      %v924 = vpop.permute.xlu0 %923
      %925 = vrot.lane.b32.xlu0 %v906, 48
      %v926 = vpop.permute.xlu0 %925
      %927 = vrot.lane.b32.xlu0 %v907, 48
      %v928 = vpop.permute.xlu0 %927
      %929 = vrot.lane.b32.xlu0 %v908, 48
      %v930 = vpop.permute.xlu0 %929
      %931 = vrot.lane.b32.xlu0 %v909, 48
      %v932 = vpop.permute.xlu0 %931
      %933 = vrot.lane.b32.xlu0 %v910, 48
      %v934 = vpop.permute.xlu0 %933
      %vm943 = vcmask 425344
      %944 = vst.msk [vmem:[#allocation2] sm:$0xff] %vm943, %v920
      %945 = vst.msk [vmem:[#allocation2 + $0x8] sm:$0xff] %vm943, %v922
      %946 = vst.msk [vmem:[#allocation2 + $0x10] sm:$0xff] %vm943, %v924
      %947 = vst.msk [vmem:[#allocation2 + $0x18] sm:$0xff] %vm943, %v926
      %948 = vst.msk [vmem:[#allocation2 + $0x20] sm:$0xff] %vm943, %v928
      %949 = vst.msk [vmem:[#allocation2 + $0x28] sm:$0xff] %vm943, %v930
      %950 = vst.msk [vmem:[#allocation2 + $0x30] sm:$0xff] %vm943, %v932
      %951 = vst.msk [vmem:[#allocation2 + $0x38] sm:$0xff] %vm943, %v934
      %v952 = vld [vmem:[%s902 + $0x1] sm:$0xff]
      %v953 = vld [vmem:[%s902 + $0x11] sm:$0xff]
      %v954 = vld [vmem:[%s902 + $0x21] sm:$0xff]
      %v955 = vld [vmem:[%s902 + $0x31] sm:$0xff]
      %v956 = vld [vmem:[%s902 + $0x41] sm:$0xff]
      %v957 = vld [vmem:[%s902 + $0x51] sm:$0xff]
      %v958 = vld [vmem:[%s902 + $0x61] sm:$0xff]
      %v959 = vld [vmem:[%s902 + $0x71] sm:$0xff]
      %968 = vrot.lane.b32.xlu0 %v952, 52
      %v969 = vpop.permute.xlu0 %968
      %970 = vrot.lane.b32.xlu0 %v953, 52
      %v971 = vpop.permute.xlu0 %970
      %972 = vrot.lane.b32.xlu0 %v954, 52
      %v973 = vpop.permute.xlu0 %972
      %974 = vrot.lane.b32.xlu0 %v955, 52
      %v975 = vpop.permute.xlu0 %974
      %976 = vrot.lane.b32.xlu0 %v956, 52
      %v977 = vpop.permute.xlu0 %976
      %978 = vrot.lane.b32.xlu0 %v957, 52
      %v979 = vpop.permute.xlu0 %978
      %980 = vrot.lane.b32.xlu0 %v958, 52
      %v981 = vpop.permute.xlu0 %980
      %982 = vrot.lane.b32.xlu0 %v959, 52
      %v983 = vpop.permute.xlu0 %982
      %vm992 = vcmask 458144
      %993 = vst.msk [vmem:[#allocation2] sm:$0xff] %vm992, %v969
      %994 = vst.msk [vmem:[#allocation2 + $0x8] sm:$0xff] %vm992, %v971
      %995 = vst.msk [vmem:[#allocation2 + $0x10] sm:$0xff] %vm992, %v973
      %996 = vst.msk [vmem:[#allocation2 + $0x18] sm:$0xff] %vm992, %v975
      %997 = vst.msk [vmem:[#allocation2 + $0x20] sm:$0xff] %vm992, %v977
      %998 = vst.msk [vmem:[#allocation2 + $0x28] sm:$0xff] %vm992, %v979
      %999 = vst.msk [vmem:[#allocation2 + $0x30] sm:$0xff] %vm992, %v981
      %1000 = vst.msk [vmem:[#allocation2 + $0x38] sm:$0xff] %vm992, %v983
      %v1001 = vld [vmem:[%s902 + $0x2] sm:$0xff]
      %v1002 = vld [vmem:[%s902 + $0x12] sm:$0xff]
      %v1003 = vld [vmem:[%s902 + $0x22] sm:$0xff]
      %v1004 = vld [vmem:[%s902 + $0x32] sm:$0xff]
      %v1005 = vld [vmem:[%s902 + $0x42] sm:$0xff]
      %v1006 = vld [vmem:[%s902 + $0x52] sm:$0xff]
      %v1007 = vld [vmem:[%s902 + $0x62] sm:$0xff]
      %v1008 = vld [vmem:[%s902 + $0x72] sm:$0xff]
      %1017 = vrot.lane.b32.xlu0 %v1001, 56
      %v1018 = vpop.permute.xlu0 %1017
      %1019 = vrot.lane.b32.xlu0 %v1002, 56
      %v1020 = vpop.permute.xlu0 %1019
      %1021 = vrot.lane.b32.xlu0 %v1003, 56
      %v1022 = vpop.permute.xlu0 %1021
      %1023 = vrot.lane.b32.xlu0 %v1004, 56
      %v1024 = vpop.permute.xlu0 %1023
      %1025 = vrot.lane.b32.xlu0 %v1005, 56
      %v1026 = vpop.permute.xlu0 %1025
      %1027 = vrot.lane.b32.xlu0 %v1006, 56
      %v1028 = vpop.permute.xlu0 %1027
      %1029 = vrot.lane.b32.xlu0 %v1007, 56
      %v1030 = vpop.permute.xlu0 %1029
      %1031 = vrot.lane.b32.xlu0 %v1008, 56
      %v1032 = vpop.permute.xlu0 %1031
      %vm1041 = vcmask 490944
      %1042 = vst.msk [vmem:[#allocation2] sm:$0xff] %vm1041, %v1018
      %1043 = vst.msk [vmem:[#allocation2 + $0x8] sm:$0xff] %vm1041, %v1020
      %1044 = vst.msk [vmem:[#allocation2 + $0x10] sm:$0xff] %vm1041, %v1022
      %1045 = vst.msk [vmem:[#allocation2 + $0x18] sm:$0xff] %vm1041, %v1024
      %1046 = vst.msk [vmem:[#allocation2 + $0x20] sm:$0xff] %vm1041, %v1026
      %1047 = vst.msk [vmem:[#allocation2 + $0x28] sm:$0xff] %vm1041, %v1028
      %1048 = vst.msk [vmem:[#allocation2 + $0x30] sm:$0xff] %vm1041, %v1030
      %1049 = vst.msk [vmem:[#allocation2 + $0x38] sm:$0xff] %vm1041, %v1032
      %s1050 = scalar_lea.vmem %s321, 32
      %v1051 = vld [vmem:[%s1050] sm:$0xff]
      %v1052 = vld [vmem:[%s1050 + $0x10] sm:$0xff]
      %v1053 = vld [vmem:[%s1050 + $0x20] sm:$0xff]
      %v1054 = vld [vmem:[%s1050 + $0x30] sm:$0xff]
      %v1055 = vld [vmem:[%s1050 + $0x40] sm:$0xff]
      %v1056 = vld [vmem:[%s1050 + $0x50] sm:$0xff]
      %v1057 = vld [vmem:[%s1050 + $0x60] sm:$0xff]
      %v1058 = vld [vmem:[%s1050 + $0x70] sm:$0xff]
      %1067 = vrot.lane.b32.xlu0 %v1051, 60
      %v1068 = vpop.permute.xlu0 %1067
      %1069 = vrot.lane.b32.xlu0 %v1052, 60
      %v1070 = vpop.permute.xlu0 %1069
      %1071 = vrot.lane.b32.xlu0 %v1053, 60
      %v1072 = vpop.permute.xlu0 %1071
      %1073 = vrot.lane.b32.xlu0 %v1054, 60
      %v1074 = vpop.permute.xlu0 %1073
      %1075 = vrot.lane.b32.xlu0 %v1055, 60
      %v1076 = vpop.permute.xlu0 %1075
      %1077 = vrot.lane.b32.xlu0 %v1056, 60
      %v1078 = vpop.permute.xlu0 %1077
      %1079 = vrot.lane.b32.xlu0 %v1057, 60
      %v1080 = vpop.permute.xlu0 %1079
      %1081 = vrot.lane.b32.xlu0 %v1058, 60
      %v1082 = vpop.permute.xlu0 %1081
      %vm1091 = vcmask 523744
      %1092 = vst.msk [vmem:[#allocation2] sm:$0xff] %vm1091, %v1068
      %1093 = vst.msk [vmem:[#allocation2 + $0x8] sm:$0xff] %vm1091, %v1070
      %1094 = vst.msk [vmem:[#allocation2 + $0x10] sm:$0xff] %vm1091, %v1072
      %1095 = vst.msk [vmem:[#allocation2 + $0x18] sm:$0xff] %vm1091, %v1074
      %1096 = vst.msk [vmem:[#allocation2 + $0x20] sm:$0xff] %vm1091, %v1076
      %1097 = vst.msk [vmem:[#allocation2 + $0x28] sm:$0xff] %vm1091, %v1078
      %1098 = vst.msk [vmem:[#allocation2 + $0x30] sm:$0xff] %vm1091, %v1080
      %1099 = vst.msk [vmem:[#allocation2 + $0x38] sm:$0xff] %vm1091, %v1082
      %v1100 = vld [vmem:[%s1050 + $0x1] sm:$0xff]
      %v1101 = vld [vmem:[%s1050 + $0x11] sm:$0xff]
      %v1102 = vld [vmem:[%s1050 + $0x21] sm:$0xff]
      %v1103 = vld [vmem:[%s1050 + $0x31] sm:$0xff]
      %v1104 = vld [vmem:[%s1050 + $0x41] sm:$0xff]
      %v1105 = vld [vmem:[%s1050 + $0x51] sm:$0xff]
      %v1106 = vld [vmem:[%s1050 + $0x61] sm:$0xff]
      %v1107 = vld [vmem:[%s1050 + $0x71] sm:$0xff]
      %1116 = vrot.lane.b32.xlu0 %v1100, 64
      %v1117 = vpop.permute.xlu0 %1116
      %1118 = vrot.lane.b32.xlu0 %v1101, 64
      %v1119 = vpop.permute.xlu0 %1118
      %1120 = vrot.lane.b32.xlu0 %v1102, 64
      %v1121 = vpop.permute.xlu0 %1120
      %1122 = vrot.lane.b32.xlu0 %v1103, 64
      %v1123 = vpop.permute.xlu0 %1122
      %1124 = vrot.lane.b32.xlu0 %v1104, 64
      %v1125 = vpop.permute.xlu0 %1124
      %1126 = vrot.lane.b32.xlu0 %v1105, 64
      %v1127 = vpop.permute.xlu0 %1126
      %1128 = vrot.lane.b32.xlu0 %v1106, 64
      %v1129 = vpop.permute.xlu0 %1128
      %1130 = vrot.lane.b32.xlu0 %v1107, 64
      %v1131 = vpop.permute.xlu0 %1130
      %vm1140 = vcmask 556544
      %1141 = vst.msk [vmem:[#allocation2] sm:$0xff] %vm1140, %v1117
      %1142 = vst.msk [vmem:[#allocation2 + $0x8] sm:$0xff] %vm1140, %v1119
      %1143 = vst.msk [vmem:[#allocation2 + $0x10] sm:$0xff] %vm1140, %v1121
      %1144 = vst.msk [vmem:[#allocation2 + $0x18] sm:$0xff] %vm1140, %v1123
      %1145 = vst.msk [vmem:[#allocation2 + $0x20] sm:$0xff] %vm1140, %v1125
      %1146 = vst.msk [vmem:[#allocation2 + $0x28] sm:$0xff] %vm1140, %v1127
      %1147 = vst.msk [vmem:[#allocation2 + $0x30] sm:$0xff] %vm1140, %v1129
      %1148 = vst.msk [vmem:[#allocation2 + $0x38] sm:$0xff] %vm1140, %v1131
      %v1149 = vld [vmem:[%s1050 + $0x2] sm:$0xff]
      %v1150 = vld [vmem:[%s1050 + $0x12] sm:$0xff]
      %v1151 = vld [vmem:[%s1050 + $0x22] sm:$0xff]
      %v1152 = vld [vmem:[%s1050 + $0x32] sm:$0xff]
      %v1153 = vld [vmem:[%s1050 + $0x42] sm:$0xff]
      %v1154 = vld [vmem:[%s1050 + $0x52] sm:$0xff]
      %v1155 = vld [vmem:[%s1050 + $0x62] sm:$0xff]
      %v1156 = vld [vmem:[%s1050 + $0x72] sm:$0xff]
      %1165 = vrot.lane.b32.xlu0 %v1149, 68
      %v1166 = vpop.permute.xlu0 %1165
      %1167 = vrot.lane.b32.xlu0 %v1150, 68
      %v1168 = vpop.permute.xlu0 %1167
      %1169 = vrot.lane.b32.xlu0 %v1151, 68
      %v1170 = vpop.permute.xlu0 %1169
      %1171 = vrot.lane.b32.xlu0 %v1152, 68
      %v1172 = vpop.permute.xlu0 %1171
      %1173 = vrot.lane.b32.xlu0 %v1153, 68
      %v1174 = vpop.permute.xlu0 %1173
      %1175 = vrot.lane.b32.xlu0 %v1154, 68
      %v1176 = vpop.permute.xlu0 %1175
      %1177 = vrot.lane.b32.xlu0 %v1155, 68
      %v1178 = vpop.permute.xlu0 %1177
      %1179 = vrot.lane.b32.xlu0 %v1156, 68
      %v1180 = vpop.permute.xlu0 %1179
      %vm1189 = vcmask 589344
      %1190 = vst.msk [vmem:[#allocation2] sm:$0xff] %vm1189, %v1166
      %1191 = vst.msk [vmem:[#allocation2 + $0x8] sm:$0xff] %vm1189, %v1168
      %1192 = vst.msk [vmem:[#allocation2 + $0x10] sm:$0xff] %vm1189, %v1170
      %1193 = vst.msk [vmem:[#allocation2 + $0x18] sm:$0xff] %vm1189, %v1172
      %1194 = vst.msk [vmem:[#allocation2 + $0x20] sm:$0xff] %vm1189, %v1174
      %1195 = vst.msk [vmem:[#allocation2 + $0x28] sm:$0xff] %vm1189, %v1176
      %1196 = vst.msk [vmem:[#allocation2 + $0x30] sm:$0xff] %vm1189, %v1178
      %1197 = vst.msk [vmem:[#allocation2 + $0x38] sm:$0xff] %vm1189, %v1180
      %v1198 = vld [vmem:[%s332] sm:$0xff]
      %v1199 = vld [vmem:[%s332 + $0x10] sm:$0xff]
      %v1200 = vld [vmem:[%s332 + $0x20] sm:$0xff]
      %v1201 = vld [vmem:[%s332 + $0x30] sm:$0xff]
      %v1202 = vld [vmem:[%s332 + $0x40] sm:$0xff]
      %v1203 = vld [vmem:[%s332 + $0x50] sm:$0xff]
      %v1204 = vld [vmem:[%s332 + $0x60] sm:$0xff]
      %v1205 = vld [vmem:[%s332 + $0x70] sm:$0xff]
      %1214 = vrot.lane.b32.xlu0 %v1198, 72
      %v1215 = vpop.permute.xlu0 %1214
      %1216 = vrot.lane.b32.xlu0 %v1199, 72
      %v1217 = vpop.permute.xlu0 %1216
      %1218 = vrot.lane.b32.xlu0 %v1200, 72
      %v1219 = vpop.permute.xlu0 %1218
      %1220 = vrot.lane.b32.xlu0 %v1201, 72
      %v1221 = vpop.permute.xlu0 %1220
      %1222 = vrot.lane.b32.xlu0 %v1202, 72
      %v1223 = vpop.permute.xlu0 %1222
      %1224 = vrot.lane.b32.xlu0 %v1203, 72
      %v1225 = vpop.permute.xlu0 %1224
      %1226 = vrot.lane.b32.xlu0 %v1204, 72
      %v1227 = vpop.permute.xlu0 %1226
      %1228 = vrot.lane.b32.xlu0 %v1205, 72
      %v1229 = vpop.permute.xlu0 %1228
      %vm1238 = vcmask 622144
      %1239 = vst.msk [vmem:[#allocation2] sm:$0xff] %vm1238, %v1215
      %1240 = vst.msk [vmem:[#allocation2 + $0x8] sm:$0xff] %vm1238, %v1217
      %1241 = vst.msk [vmem:[#allocation2 + $0x10] sm:$0xff] %vm1238, %v1219
      %1242 = vst.msk [vmem:[#allocation2 + $0x18] sm:$0xff] %vm1238, %v1221
      %1243 = vst.msk [vmem:[#allocation2 + $0x20] sm:$0xff] %vm1238, %v1223
      %1244 = vst.msk [vmem:[#allocation2 + $0x28] sm:$0xff] %vm1238, %v1225
      %1245 = vst.msk [vmem:[#allocation2 + $0x30] sm:$0xff] %vm1238, %v1227
      %1246 = vst.msk [vmem:[#allocation2 + $0x38] sm:$0xff] %vm1238, %v1229
      %v1247 = vld [vmem:[%s332 + $0x1] sm:$0xff]
      %v1248 = vld [vmem:[%s332 + $0x11] sm:$0xff]
      %v1249 = vld [vmem:[%s332 + $0x21] sm:$0xff]
      %v1250 = vld [vmem:[%s332 + $0x31] sm:$0xff]
      %v1251 = vld [vmem:[%s332 + $0x41] sm:$0xff]
      %v1252 = vld [vmem:[%s332 + $0x51] sm:$0xff]
      %v1253 = vld [vmem:[%s332 + $0x61] sm:$0xff]
      %v1254 = vld [vmem:[%s332 + $0x71] sm:$0xff]
      %1263 = vrot.lane.b32.xlu0 %v1247, 76
      %v1264 = vpop.permute.xlu0 %1263
      %1265 = vrot.lane.b32.xlu0 %v1248, 76
      %v1266 = vpop.permute.xlu0 %1265
      %1267 = vrot.lane.b32.xlu0 %v1249, 76
      %v1268 = vpop.permute.xlu0 %1267
      %1269 = vrot.lane.b32.xlu0 %v1250, 76
      %v1270 = vpop.permute.xlu0 %1269
      %1271 = vrot.lane.b32.xlu0 %v1251, 76
      %v1272 = vpop.permute.xlu0 %1271
      %1273 = vrot.lane.b32.xlu0 %v1252, 76
      %v1274 = vpop.permute.xlu0 %1273
      %1275 = vrot.lane.b32.xlu0 %v1253, 76
      %v1276 = vpop.permute.xlu0 %1275
      %1277 = vrot.lane.b32.xlu0 %v1254, 76
      %v1278 = vpop.permute.xlu0 %1277
      %vm1287 = vcmask 654944
      %1288 = vst.msk [vmem:[#allocation2] sm:$0xff] %vm1287, %v1264
      %1289 = vst.msk [vmem:[#allocation2 + $0x8] sm:$0xff] %vm1287, %v1266
      %1290 = vst.msk [vmem:[#allocation2 + $0x10] sm:$0xff] %vm1287, %v1268
      %1291 = vst.msk [vmem:[#allocation2 + $0x18] sm:$0xff] %vm1287, %v1270
      %1292 = vst.msk [vmem:[#allocation2 + $0x20] sm:$0xff] %vm1287, %v1272
      %1293 = vst.msk [vmem:[#allocation2 + $0x28] sm:$0xff] %vm1287, %v1274
      %1294 = vst.msk [vmem:[#allocation2 + $0x30] sm:$0xff] %vm1287, %v1276
      %1295 = vst.msk [vmem:[#allocation2 + $0x38] sm:$0xff] %vm1287, %v1278
      %v1296 = vld [vmem:[%s332 + $0x2] sm:$0xff]
      %v1297 = vld [vmem:[%s332 + $0x12] sm:$0xff]
      %v1298 = vld [vmem:[%s332 + $0x22] sm:$0xff]
      %v1299 = vld [vmem:[%s332 + $0x32] sm:$0xff]
      %v1300 = vld [vmem:[%s332 + $0x42] sm:$0xff]
      %v1301 = vld [vmem:[%s332 + $0x52] sm:$0xff]
      %v1302 = vld [vmem:[%s332 + $0x62] sm:$0xff]
      %v1303 = vld [vmem:[%s332 + $0x72] sm:$0xff]
      %1312 = vrot.lane.b32.xlu0 %v1296, 80
      %v1313 = vpop.permute.xlu0 %1312
      %1314 = vrot.lane.b32.xlu0 %v1297, 80
      %v1315 = vpop.permute.xlu0 %1314
      %1316 = vrot.lane.b32.xlu0 %v1298, 80
      %v1317 = vpop.permute.xlu0 %1316
      %1318 = vrot.lane.b32.xlu0 %v1299, 80
      %v1319 = vpop.permute.xlu0 %1318
      %1320 = vrot.lane.b32.xlu0 %v1300, 80
      %v1321 = vpop.permute.xlu0 %1320
      %1322 = vrot.lane.b32.xlu0 %v1301, 80
      %v1323 = vpop.permute.xlu0 %1322
      %1324 = vrot.lane.b32.xlu0 %v1302, 80
      %v1325 = vpop.permute.xlu0 %1324
      %1326 = vrot.lane.b32.xlu0 %v1303, 80
      %v1327 = vpop.permute.xlu0 %1326
      %vm1336 = vcmask 687744
      %1337 = vst.msk [vmem:[#allocation2] sm:$0xff] %vm1336, %v1313
      %1338 = vst.msk [vmem:[#allocation2 + $0x8] sm:$0xff] %vm1336, %v1315
      %1339 = vst.msk [vmem:[#allocation2 + $0x10] sm:$0xff] %vm1336, %v1317
      %1340 = vst.msk [vmem:[#allocation2 + $0x18] sm:$0xff] %vm1336, %v1319
      %1341 = vst.msk [vmem:[#allocation2 + $0x20] sm:$0xff] %vm1336, %v1321
      %1342 = vst.msk [vmem:[#allocation2 + $0x28] sm:$0xff] %vm1336, %v1323
      %1343 = vst.msk [vmem:[#allocation2 + $0x30] sm:$0xff] %vm1336, %v1325
      %1344 = vst.msk [vmem:[#allocation2 + $0x38] sm:$0xff] %vm1336, %v1327
      %s1345 = scalar_lea.vmem %s332, 16
      %v1346 = vld [vmem:[%s1345] sm:$0xff]
      %v1347 = vld [vmem:[%s1345 + $0x10] sm:$0xff]
      %v1348 = vld [vmem:[%s1345 + $0x20] sm:$0xff]
      %v1349 = vld [vmem:[%s1345 + $0x30] sm:$0xff]
      %v1350 = vld [vmem:[%s1345 + $0x40] sm:$0xff]
      %v1351 = vld [vmem:[%s1345 + $0x50] sm:$0xff]
      %v1352 = vld [vmem:[%s1345 + $0x60] sm:$0xff]
      %v1353 = vld [vmem:[%s1345 + $0x70] sm:$0xff]
      %1362 = vrot.lane.b32.xlu0 %v1346, 84
      %v1363 = vpop.permute.xlu0 %1362
      %1364 = vrot.lane.b32.xlu0 %v1347, 84
      %v1365 = vpop.permute.xlu0 %1364
      %1366 = vrot.lane.b32.xlu0 %v1348, 84
      %v1367 = vpop.permute.xlu0 %1366
      %1368 = vrot.lane.b32.xlu0 %v1349, 84
      %v1369 = vpop.permute.xlu0 %1368
      %1370 = vrot.lane.b32.xlu0 %v1350, 84
      %v1371 = vpop.permute.xlu0 %1370
      %1372 = vrot.lane.b32.xlu0 %v1351, 84
      %v1373 = vpop.permute.xlu0 %1372
      %1374 = vrot.lane.b32.xlu0 %v1352, 84
      %v1375 = vpop.permute.xlu0 %1374
      %1376 = vrot.lane.b32.xlu0 %v1353, 84
      %v1377 = vpop.permute.xlu0 %1376
      %vm1386 = vcmask 720544
      %1387 = vst.msk [vmem:[#allocation2] sm:$0xff] %vm1386, %v1363
      %1388 = vst.msk [vmem:[#allocation2 + $0x8] sm:$0xff] %vm1386, %v1365
      %1389 = vst.msk [vmem:[#allocation2 + $0x10] sm:$0xff] %vm1386, %v1367
      %1390 = vst.msk [vmem:[#allocation2 + $0x18] sm:$0xff] %vm1386, %v1369
      %1391 = vst.msk [vmem:[#allocation2 + $0x20] sm:$0xff] %vm1386, %v1371
      %1392 = vst.msk [vmem:[#allocation2 + $0x28] sm:$0xff] %vm1386, %v1373
      %1393 = vst.msk [vmem:[#allocation2 + $0x30] sm:$0xff] %vm1386, %v1375
      %1394 = vst.msk [vmem:[#allocation2 + $0x38] sm:$0xff] %vm1386, %v1377
      %v1395 = vld [vmem:[%s1345 + $0x1] sm:$0xff]
      %v1396 = vld [vmem:[%s1345 + $0x11] sm:$0xff]
      %v1397 = vld [vmem:[%s1345 + $0x21] sm:$0xff]
      %v1398 = vld [vmem:[%s1345 + $0x31] sm:$0xff]
      %v1399 = vld [vmem:[%s1345 + $0x41] sm:$0xff]
      %v1400 = vld [vmem:[%s1345 + $0x51] sm:$0xff]
      %v1401 = vld [vmem:[%s1345 + $0x61] sm:$0xff]
      %v1402 = vld [vmem:[%s1345 + $0x71] sm:$0xff]
      %1411 = vrot.lane.b32.xlu0 %v1395, 88
      %v1412 = vpop.permute.xlu0 %1411
      %1413 = vrot.lane.b32.xlu0 %v1396, 88
      %v1414 = vpop.permute.xlu0 %1413
      %1415 = vrot.lane.b32.xlu0 %v1397, 88
      %v1416 = vpop.permute.xlu0 %1415
      %1417 = vrot.lane.b32.xlu0 %v1398, 88
      %v1418 = vpop.permute.xlu0 %1417
      %1419 = vrot.lane.b32.xlu0 %v1399, 88
      %v1420 = vpop.permute.xlu0 %1419
      %1421 = vrot.lane.b32.xlu0 %v1400, 88
      %v1422 = vpop.permute.xlu0 %1421
      %1423 = vrot.lane.b32.xlu0 %v1401, 88
      %v1424 = vpop.permute.xlu0 %1423
      %1425 = vrot.lane.b32.xlu0 %v1402, 88
      %v1426 = vpop.permute.xlu0 %1425
      %vm1435 = vcmask 753344
      %1436 = vst.msk [vmem:[#allocation2] sm:$0xff] %vm1435, %v1412
      %1437 = vst.msk [vmem:[#allocation2 + $0x8] sm:$0xff] %vm1435, %v1414
      %1438 = vst.msk [vmem:[#allocation2 + $0x10] sm:$0xff] %vm1435, %v1416
      %1439 = vst.msk [vmem:[#allocation2 + $0x18] sm:$0xff] %vm1435, %v1418
      %1440 = vst.msk [vmem:[#allocation2 + $0x20] sm:$0xff] %vm1435, %v1420
      %1441 = vst.msk [vmem:[#allocation2 + $0x28] sm:$0xff] %vm1435, %v1422
      %1442 = vst.msk [vmem:[#allocation2 + $0x30] sm:$0xff] %vm1435, %v1424
      %1443 = vst.msk [vmem:[#allocation2 + $0x38] sm:$0xff] %vm1435, %v1426
      %v1444 = vld [vmem:[%s1345 + $0x2] sm:$0xff]
      %v1445 = vld [vmem:[%s1345 + $0x12] sm:$0xff]
      %v1446 = vld [vmem:[%s1345 + $0x22] sm:$0xff]
      %v1447 = vld [vmem:[%s1345 + $0x32] sm:$0xff]
      %v1448 = vld [vmem:[%s1345 + $0x42] sm:$0xff]
      %v1449 = vld [vmem:[%s1345 + $0x52] sm:$0xff]
      %v1450 = vld [vmem:[%s1345 + $0x62] sm:$0xff]
      %v1451 = vld [vmem:[%s1345 + $0x72] sm:$0xff]
      %1460 = vrot.lane.b32.xlu0 %v1444, 92
      %v1461 = vpop.permute.xlu0 %1460
      %1462 = vrot.lane.b32.xlu0 %v1445, 92
      %v1463 = vpop.permute.xlu0 %1462
      %1464 = vrot.lane.b32.xlu0 %v1446, 92
      %v1465 = vpop.permute.xlu0 %1464
      %1466 = vrot.lane.b32.xlu0 %v1447, 92
      %v1467 = vpop.permute.xlu0 %1466
      %1468 = vrot.lane.b32.xlu0 %v1448, 92
      %v1469 = vpop.permute.xlu0 %1468
      %1470 = vrot.lane.b32.xlu0 %v1449, 92
      %v1471 = vpop.permute.xlu0 %1470
      %1472 = vrot.lane.b32.xlu0 %v1450, 92
      %v1473 = vpop.permute.xlu0 %1472
      %1474 = vrot.lane.b32.xlu0 %v1451, 92
      %v1475 = vpop.permute.xlu0 %1474
      %vm1484 = vcmask 786144
      %1485 = vst.msk [vmem:[#allocation2] sm:$0xff] %vm1484, %v1461
      %1486 = vst.msk [vmem:[#allocation2 + $0x8] sm:$0xff] %vm1484, %v1463
      %1487 = vst.msk [vmem:[#allocation2 + $0x10] sm:$0xff] %vm1484, %v1465
      %1488 = vst.msk [vmem:[#allocation2 + $0x18] sm:$0xff] %vm1484, %v1467
      %1489 = vst.msk [vmem:[#allocation2 + $0x20] sm:$0xff] %vm1484, %v1469
      %1490 = vst.msk [vmem:[#allocation2 + $0x28] sm:$0xff] %vm1484, %v1471
      %1491 = vst.msk [vmem:[#allocation2 + $0x30] sm:$0xff] %vm1484, %v1473
      %1492 = vst.msk [vmem:[#allocation2 + $0x38] sm:$0xff] %vm1484, %v1475
      %s1493 = scalar_lea.vmem %s332, 32
      %v1494 = vld [vmem:[%s1493] sm:$0xff]
      %v1495 = vld [vmem:[%s1493 + $0x10] sm:$0xff]
      %v1496 = vld [vmem:[%s1493 + $0x20] sm:$0xff]
      %v1497 = vld [vmem:[%s1493 + $0x30] sm:$0xff]
      %v1498 = vld [vmem:[%s1493 + $0x40] sm:$0xff]
      %v1499 = vld [vmem:[%s1493 + $0x50] sm:$0xff]
      %v1500 = vld [vmem:[%s1493 + $0x60] sm:$0xff]
      %v1501 = vld [vmem:[%s1493 + $0x70] sm:$0xff]
      %1510 = vrot.lane.b32.xlu0 %v1494, 96
      %v1511 = vpop.permute.xlu0 %1510
      %1512 = vrot.lane.b32.xlu0 %v1495, 96
      %v1513 = vpop.permute.xlu0 %1512
      %1514 = vrot.lane.b32.xlu0 %v1496, 96
      %v1515 = vpop.permute.xlu0 %1514
      %1516 = vrot.lane.b32.xlu0 %v1497, 96
      %v1517 = vpop.permute.xlu0 %1516
      %1518 = vrot.lane.b32.xlu0 %v1498, 96
      %v1519 = vpop.permute.xlu0 %1518
      %1520 = vrot.lane.b32.xlu0 %v1499, 96
      %v1521 = vpop.permute.xlu0 %1520
      %1522 = vrot.lane.b32.xlu0 %v1500, 96
      %v1523 = vpop.permute.xlu0 %1522
      %1524 = vrot.lane.b32.xlu0 %v1501, 96
      %v1525 = vpop.permute.xlu0 %1524
      %vm1534 = vcmask 818944
      %1535 = vst.msk [vmem:[#allocation2] sm:$0xff] %vm1534, %v1511
      %1536 = vst.msk [vmem:[#allocation2 + $0x8] sm:$0xff] %vm1534, %v1513
      %1537 = vst.msk [vmem:[#allocation2 + $0x10] sm:$0xff] %vm1534, %v1515
      %1538 = vst.msk [vmem:[#allocation2 + $0x18] sm:$0xff] %vm1534, %v1517
      %1539 = vst.msk [vmem:[#allocation2 + $0x20] sm:$0xff] %vm1534, %v1519
      %1540 = vst.msk [vmem:[#allocation2 + $0x28] sm:$0xff] %vm1534, %v1521
      %1541 = vst.msk [vmem:[#allocation2 + $0x30] sm:$0xff] %vm1534, %v1523
      %1542 = vst.msk [vmem:[#allocation2 + $0x38] sm:$0xff] %vm1534, %v1525
      %v1543 = vld [vmem:[%s1493 + $0x1] sm:$0xff]
      %v1544 = vld [vmem:[%s1493 + $0x11] sm:$0xff]
      %v1545 = vld [vmem:[%s1493 + $0x21] sm:$0xff]
      %v1546 = vld [vmem:[%s1493 + $0x31] sm:$0xff]
      %v1547 = vld [vmem:[%s1493 + $0x41] sm:$0xff]
      %v1548 = vld [vmem:[%s1493 + $0x51] sm:$0xff]
      %v1549 = vld [vmem:[%s1493 + $0x61] sm:$0xff]
      %v1550 = vld [vmem:[%s1493 + $0x71] sm:$0xff]
      %1559 = vrot.lane.b32.xlu0 %v1543, 100
      %v1560 = vpop.permute.xlu0 %1559
      %1561 = vrot.lane.b32.xlu0 %v1544, 100
      %v1562 = vpop.permute.xlu0 %1561
      %1563 = vrot.lane.b32.xlu0 %v1545, 100
      %v1564 = vpop.permute.xlu0 %1563
      %1565 = vrot.lane.b32.xlu0 %v1546, 100
      %v1566 = vpop.permute.xlu0 %1565
      %1567 = vrot.lane.b32.xlu0 %v1547, 100
      %v1568 = vpop.permute.xlu0 %1567
      %1569 = vrot.lane.b32.xlu0 %v1548, 100
      %v1570 = vpop.permute.xlu0 %1569
      %1571 = vrot.lane.b32.xlu0 %v1549, 100
      %v1572 = vpop.permute.xlu0 %1571
      %1573 = vrot.lane.b32.xlu0 %v1550, 100
      %v1574 = vpop.permute.xlu0 %1573
      %vm1583 = vcmask 851744
      %1584 = vst.msk [vmem:[#allocation2] sm:$0xff] %vm1583, %v1560
      %1585 = vst.msk [vmem:[#allocation2 + $0x8] sm:$0xff] %vm1583, %v1562
      %1586 = vst.msk [vmem:[#allocation2 + $0x10] sm:$0xff] %vm1583, %v1564
      %1587 = vst.msk [vmem:[#allocation2 + $0x18] sm:$0xff] %vm1583, %v1566
      %1588 = vst.msk [vmem:[#allocation2 + $0x20] sm:$0xff] %vm1583, %v1568
      %1589 = vst.msk [vmem:[#allocation2 + $0x28] sm:$0xff] %vm1583, %v1570
      %1590 = vst.msk [vmem:[#allocation2 + $0x30] sm:$0xff] %vm1583, %v1572
      %1591 = vst.msk [vmem:[#allocation2 + $0x38] sm:$0xff] %vm1583, %v1574
      %v1592 = vld [vmem:[%s1493 + $0x2] sm:$0xff]
      %v1593 = vld [vmem:[%s1493 + $0x12] sm:$0xff]
      %v1594 = vld [vmem:[%s1493 + $0x22] sm:$0xff]
      %v1595 = vld [vmem:[%s1493 + $0x32] sm:$0xff]
      %v1596 = vld [vmem:[%s1493 + $0x42] sm:$0xff]
      %v1597 = vld [vmem:[%s1493 + $0x52] sm:$0xff]
      %v1598 = vld [vmem:[%s1493 + $0x62] sm:$0xff]
      %v1599 = vld [vmem:[%s1493 + $0x72] sm:$0xff]
      %1608 = vrot.lane.b32.xlu0 %v1592, 104
      %v1609 = vpop.permute.xlu0 %1608
      %1610 = vrot.lane.b32.xlu0 %v1593, 104
      %v1611 = vpop.permute.xlu0 %1610
      %1612 = vrot.lane.b32.xlu0 %v1594, 104
      %v1613 = vpop.permute.xlu0 %1612
      %1614 = vrot.lane.b32.xlu0 %v1595, 104
      %v1615 = vpop.permute.xlu0 %1614
      %1616 = vrot.lane.b32.xlu0 %v1596, 104
      %v1617 = vpop.permute.xlu0 %1616
      %1618 = vrot.lane.b32.xlu0 %v1597, 104
      %v1619 = vpop.permute.xlu0 %1618
      %1620 = vrot.lane.b32.xlu0 %v1598, 104
      %v1621 = vpop.permute.xlu0 %1620
      %1622 = vrot.lane.b32.xlu0 %v1599, 104
      %v1623 = vpop.permute.xlu0 %1622
      %vm1632 = vcmask 884544
      %1633 = vst.msk [vmem:[#allocation2] sm:$0xff] %vm1632, %v1609
      %1634 = vst.msk [vmem:[#allocation2 + $0x8] sm:$0xff] %vm1632, %v1611
      %1635 = vst.msk [vmem:[#allocation2 + $0x10] sm:$0xff] %vm1632, %v1613
      %1636 = vst.msk [vmem:[#allocation2 + $0x18] sm:$0xff] %vm1632, %v1615
      %1637 = vst.msk [vmem:[#allocation2 + $0x20] sm:$0xff] %vm1632, %v1617
      %1638 = vst.msk [vmem:[#allocation2 + $0x28] sm:$0xff] %vm1632, %v1619
      %1639 = vst.msk [vmem:[#allocation2 + $0x30] sm:$0xff] %vm1632, %v1621
      %1640 = vst.msk [vmem:[#allocation2 + $0x38] sm:$0xff] %vm1632, %v1623
      %v1641 = vld [vmem:[#allocation2] sm:$0xff]
      %v1642 = vld [vmem:[#allocation2 + $0x8] sm:$0xff]
      %v1643 = vld [vmem:[#allocation2 + $0x10] sm:$0xff]
      %v1644 = vld [vmem:[#allocation2 + $0x18] sm:$0xff]
      %v1645 = vld [vmem:[#allocation2 + $0x20] sm:$0xff]
      %v1646 = vld [vmem:[#allocation2 + $0x28] sm:$0xff]
      %v1647 = vld [vmem:[#allocation2 + $0x30] sm:$0xff]
      %v1648 = vld [vmem:[#allocation2 + $0x38] sm:$0xff]
      %v1649 = vpack.c.bf16 %v1642, %v1641
      %v1650 = vpack.c.bf16 %v1644, %v1643
      %v1651 = vpack.c.bf16 %v1646, %v1645
      %v1652 = vpack.c.bf16 %v1648, %v1647
      %v1653 = vld [vmem:[%s3] sm:$0xf]
      %v1654 = vld [vmem:[%s3 + $0x4] sm:$0xf]
      %v1655 = vld [vmem:[%s3 + $0x8] sm:$0xf]
      %v1656 = vld [vmem:[%s3 + $0xc] sm:$0xf]
      %v1657 = vld [vmem:[%s3 + $0x10] sm:$0xf]
      %v1658 = vld [vmem:[%s3 + $0x14] sm:$0xf]
      %v1659 = vld [vmem:[%s3 + $0x18] sm:$0xf]
      %v1660 = vld [vmem:[%s3 + $0x1c] sm:$0xf]
      %v1661 = vld [vmem:[%s3 + $0x20] sm:$0xf]
      %v1662 = vld [vmem:[%s3 + $0x24] sm:$0xf]
      %v1663 = vld [vmem:[%s3 + $0x28] sm:$0xf]
      %v1664 = vld [vmem:[%s3 + $0x2c] sm:$0xf]
      %v1665 = vld [vmem:[%s3 + $0x30] sm:$0xf]
      %v1666 = vld [vmem:[%s3 + $0x34] sm:$0x3]
      %v1667 = vld [vmem:[%s4] sm:$0x1]
      %v1669 = vlaneseq
      %v1670 = vshrl.u32 %v1669, 7
      %v1671 = vsub.s32 0, %v1670
      %v1672 = vrot.slane %v1667, %v1671
      %v1688 = vunpack.c.l.b16 %v1653
      %v1689 = vunpack.c.l.b16 %v1654
      %v1690 = vunpack.c.l.b16 %v1655
      %v1691 = vunpack.c.l.b16 %v1656
      %v1692 = vunpack.c.l.b16 %v1657
      %v1693 = vunpack.c.l.b16 %v1658
      %v1694 = vunpack.c.l.b16 %v1659
      %v1695 = vunpack.c.l.b16 %v1660
      %v1696 = vunpack.c.l.b16 %v1661
      %v1697 = vunpack.c.l.b16 %v1662
      %v1698 = vunpack.c.l.b16 %v1663
      %v1699 = vunpack.c.l.b16 %v1664
      %v1700 = vunpack.c.l.b16 %v1665
      %v1701 = vunpack.c.l.b16 %v1666
      %v1702 = vpack.c.b16 %v1689, %v1688
      %v1703 = vpack.c.b16 %v1691, %v1690
      %v1704 = vpack.c.b16 %v1693, %v1692
      %v1705 = vpack.c.b16 %v1695, %v1694
      %v1706 = vpack.c.b16 %v1697, %v1696
      %v1707 = vpack.c.b16 %v1699, %v1698
      %v1708 = vpack.c.b16 %v1701, %v1700
      %vm1715 = vcmask 883712
      %v1717 = vsel %vm1715, %v1649, 0
      %v1720 = vsel %vm1715, %v1650, 0
      %v1723 = vsel %vm1715, %v1651, 0
      %v1726 = vsel %vm1715, %v1652, 0
      %vm1728 = vcmask 1045504
      %v1730 = vsel %vm1728, %v1708, 0
      %1732 = vmatprep.subr.bf16.mxu0 0
      %1733 = vmatpush1.bf16.msra.mxu0 %v1702
      %1734 = vmatprep.subr.bf16.mxu0 0
      %1735 = vmatpush1.bf16.msra.mxu0 %v1703
      %1736 = vmatprep.subr.bf16.mxu0 0
      %1737 = vmatpush1.bf16.msra.mxu0 %v1704
      %1738 = vmatprep.subr.bf16.mxu0 0
      %1739 = vmatpush1.bf16.msra.mxu0 %v1705
      %1740 = vmatprep.subr.bf16.mxu0 0
      %1741 = vmatpush1.bf16.msra.mxu0 %v1706
      %1742 = vmatprep.subr.bf16.mxu0 0
      %1743 = vmatpush1.bf16.msra.mxu0 %v1707
      %1744 = vmatprep.subr.bf16.mxu0 0
      %1745 = vmatpush1.bf16.msra.mxu0 %v1730
      %1746 = vmatprep.subr.bf16.mxu0 0
      %1747 = vmatpush1.bf16.msra.mxu0 0
      %1748 = vmatprep.subr.bf16.mxu0 0
      %1749 = vmatpush1.bf16.msra.mxu0 0
      %1750 = vmatprep.subr.bf16.mxu0 0
      %1751 = vmatpush1.bf16.msra.mxu0 0
      %1752 = vmatprep.subr.bf16.mxu0 0
      %1753 = vmatpush1.bf16.msra.mxu0 0
      %1754 = vmatprep.subr.bf16.mxu0 0
      %1755 = vmatpush1.bf16.msra.mxu0 0
      %1756 = vmatprep.subr.bf16.mxu0 0
      %1757 = vmatpush1.bf16.msra.mxu0 0
      %1758 = vmatprep.subr.bf16.mxu0 0
      %1759 = vmatpush1.bf16.msra.mxu0 0
      %1760 = vmatprep.subr.bf16.mxu0 0
      %1761 = vmatpush1.bf16.msra.mxu0 0
      %1762 = vmatprep.subr.bf16.mxu0 0
      %1763 = vmatpush1.bf16.msra.mxu0 0
      %1764 = vmatprep.mubr.bf16.mxu0 0
      %1765 = vmatmul.mubr.bf16.gmra.mrb[0].mxu0 %v1717
      %v1766 = vpop.f32.mrb[0].mxu0
      %v1767 = vadd.f32 %v1672, %v1766
      %v1768 = vpop.f32.mrb[0].mxu0
      %v1769 = vpop.f32.mrb[0].mxu0
      %v1770 = vadd.f32 %v1672, %v1769
      %v1771 = vpop.f32.mrb[0].mxu0
      %1772 = vmatprep.mubr.bf16.mxu0 0
      %1773 = vmatmul.mubr.bf16.gmra.mrb[0].mxu0 %v1720
      %v1774 = vpop.f32.mrb[0].mxu0
      %v1775 = vadd.f32 %v1672, %v1774
      %v1776 = vpop.f32.mrb[0].mxu0
      %v1777 = vpop.f32.mrb[0].mxu0
      %v1778 = vadd.f32 %v1672, %v1777
      %v1779 = vpop.f32.mrb[0].mxu0
      %1780 = vmatprep.mubr.bf16.mxu0 0
      %1781 = vmatmul.mubr.bf16.gmra.mrb[0].mxu0 %v1723
      %v1782 = vpop.f32.mrb[0].mxu0
      %v1783 = vadd.f32 %v1672, %v1782
      %v1784 = vpop.f32.mrb[0].mxu0
      %v1785 = vpop.f32.mrb[0].mxu0
      %v1786 = vadd.f32 %v1672, %v1785
      %v1787 = vpop.f32.mrb[0].mxu0
      %1788 = vmatprep.mubr.bf16.mxu0 0
      %1789 = vmatmul.mubr.bf16.gmra.mrb[0].mxu0 %v1726
      %v1790 = vpop.f32.mrb[0].mxu0
      %v1791 = vadd.f32 %v1672, %v1790
      %v1792 = vpop.f32.mrb[0].mxu0
      %v1793 = vpop.f32.mrb[0].mxu0
      %v1794 = vadd.f32 %v1672, %v1793
      %v1795 = vpop.f32.mrb[0].mxu0
      %1796 = vdwg.mxu0
      %vm1797 = vcmp.gt.f32.partialorder %v1767, 0.0
      %vm1798 = vcmp.gt.f32.partialorder %v1770, 0.0
      %vm1799 = vcmp.gt.f32.partialorder %v1775, 0.0
      %vm1800 = vcmp.gt.f32.partialorder %v1778, 0.0
      %vm1801 = vcmp.gt.f32.partialorder %v1783, 0.0
      %vm1802 = vcmp.gt.f32.partialorder %v1786, 0.0
      %vm1803 = vcmp.gt.f32.partialorder %v1791, 0.0
      %vm1804 = vcmp.gt.f32.partialorder %v1794, 0.0
      %v1805 = vmul.f32 %v1767, 0.2
      %v1806 = vmul.f32 %v1770, 0.2
      %v1807 = vmul.f32 %v1775, 0.2
      %v1808 = vmul.f32 %v1778, 0.2
      %v1809 = vmul.f32 %v1783, 0.2
      %v1810 = vmul.f32 %v1786, 0.2
      %v1811 = vmul.f32 %v1791, 0.2
      %v1812 = vmul.f32 %v1794, 0.2
      %v1813 = vsel %vm1797, %v1767, %v1805
      %v1814 = vsel %vm1798, %v1770, %v1806
      %v1815 = vsel %vm1799, %v1775, %v1807
      %v1816 = vsel %vm1800, %v1778, %v1808
      %v1817 = vsel %vm1801, %v1783, %v1809
      %v1818 = vsel %vm1802, %v1786, %v1810
      %v1819 = vsel %vm1803, %v1791, %v1811
      %v1820 = vsel %vm1804, %v1794, %v1812
      %vm1821 = vcmask 261120
      %1822 = vst.msk [vmem:[%s342] sm:$0xff] %vm1821, %v1813
      %1823 = vst.msk [vmem:[%s342 + $0x8] sm:$0xff] %vm1821, %v1814
      %1824 = vst.msk [vmem:[%s342 + $0x10] sm:$0xff] %vm1821, %v1815
      %1825 = vst.msk [vmem:[%s342 + $0x18] sm:$0xff] %vm1821, %v1816
      %1826 = vst.msk [vmem:[%s342 + $0x20] sm:$0xff] %vm1821, %v1817
      %1827 = vst.msk [vmem:[%s342 + $0x28] sm:$0xff] %vm1821, %v1818
      %1828 = vst.msk [vmem:[%s342 + $0x30] sm:$0xff] %vm1821, %v1819
      %1829 = vst.msk [vmem:[%s342 + $0x38] sm:$0xff] %vm1821, %v1820
      %p1830 = scmp.lt.s32.totalorder %s20, 1
      %s1831 = scalar_select %p1830, %s20, 1
      %p1832 = scmp.lt.s32.totalorder %s21, 2
      %s1833 = scalar_select %p1832, %s21, 2
      %s1834 = smul.addr %s1833, 8
      %s1835 = smul.addr %s1831, 24
      %s1836 = sadd.s32 %s1834, %s1835
      %s1837 = smul.addr %s1836, 8
      %s1838 = scalar_lea.vmem %s5, %s1837
      // Predicated region
      $region41: #{tpu_custom_call.1} parent=39 // pred_check
        %p1839 = pneg %p178
      $region42: #{tpu_custom_call.1} parent=39 // pred_check_branch
        %1841 = sbr.rel (%p1839) target = $region44
      $region43: #{tpu_custom_call.1} parent=39 // pred_region
        _
      $region44: #{tpu_custom_call.1} parent=39 // pred_fallthru
        _
    $region40: #{tpu_custom_call.1} parent=5 // pred_fallthru
      _
    %p1842 = scmp.le.s32.totalorder 2, %s11
    // Predicated region
    $region45: #{tpu_custom_call.1} parent=5 // pred_check
      %p1843 = pneg %p1842
    $region46: #{tpu_custom_call.1} parent=5 // pred_check_branch
      %1845 = sbr.rel (%p1843) target = $region48
    $region47: #{tpu_custom_call.1} parent=5 // pred_region
      %s1846 = ssub.s32 %s11, 2
      // Predicated region
      $region49: #{tpu_custom_call.1} parent=47 // pred_check
        %p1847 = pneg %p184
      $region50: #{tpu_custom_call.1} parent=47 // pred_check_branch
        %1849 = sbr.rel (%p1847) target = $region52
      $region51: #{tpu_custom_call.1} parent=47 // pred_region
        %p1850 = scmp.lt.s32.totalorder %s22, 1
        %s1851 = scalar_select %p1850, %s22, 1
        %p1852 = scmp.lt.s32.totalorder %s23, 2
        %s1853 = scalar_select %p1852, %s23, 2
        %s1854 = smul.addr %s1853, 8
        %s1855 = smul.addr %s1851, 24
        %s1856 = sadd.s32 %s1854, %s1855
        %s1857 = smul.addr %s1856, 8
        %s1858 = scalar_lea.vmem %s5, %s1857
      $region52: #{tpu_custom_call.1} parent=47 // pred_fallthru
        _
    $region48: #{tpu_custom_call.1} parent=5 // pred_fallthru
      _
  $region6: #{tpu_custom_call.1} parent=0 // loop_footer
    %s15 = sadd.s32 1, %s11
  $region7: #{tpu_custom_call.1} parent=0 // loop_footer_branch
    %10 = sbr.rel target = $region3
  $region8: #{tpu_custom_call.1} parent=0 // loop_exit
    _

</llo_original>
